<compile_context>
chip_gen: v5e
topology: v5e:2x2
jax: 0.10.0
libtpu: 0.0.40
codegen_flags: <defaults>
</compile_context>

<pallas_src>
import functools

import jax
import jax.numpy as jnp
from jax.experimental import pallas as pl
from jax.experimental.pallas import tpu as pltpu

# Finite "minus infinity" for masking. Using a finite value (instead of -inf)
# keeps the online-softmax arithmetic NaN-free even for fully masked key tiles.
# (PyTorch SDPA returns NaN rows for fully masked queries; here they come out
#  as a uniform average instead — noted, not faked.)
_NEG_INF = -1e30


def _flash_attn_kernel(bias_ref, q_ref, k_ref, v_ref, o_ref,
                       m_sc, l_sc, acc_sc, *, scale):
    """One (batch, head, q-tile, k-tile) grid step of flash attention."""
    kv_idx = pl.program_id(3)

    @pl.when(kv_idx == 0)
    def _init():
        m_sc[...] = jnp.full(m_sc.shape, _NEG_INF, dtype=m_sc.dtype)
        l_sc[...] = jnp.zeros(l_sc.shape, dtype=l_sc.dtype)
        acc_sc[...] = jnp.zeros(acc_sc.shape, dtype=acc_sc.dtype)

    q = q_ref[0, 0]            # [tq, Dh]  bf16
    k = k_ref[0, 0]            # [tk, Dh]  bf16
    v = v_ref[0, 0]            # [tk, Dh]  bf16

    # scores: bf16 operands, f32 accumulation on the MXU.
    s = jax.lax.dot_general(q, k, (((1,), (1,)), ((), ())),
                            preferred_element_type=jnp.float32)
    s = s * scale + bias_ref[0]            # [tq, tk] + [1, tk] (key mask)

    # online softmax update
    m_prev = m_sc[...]                                         # [tq, 1]
    m_new = jnp.maximum(m_prev, jnp.max(s, axis=-1, keepdims=True))
    alpha = jnp.exp(m_prev - m_new)
    p = jnp.exp(s - m_new)                                     # [tq, tk]
    l_sc[...] = alpha * l_sc[...] + jnp.sum(p, axis=-1, keepdims=True)
    acc_sc[...] = alpha * acc_sc[...] + jax.lax.dot_general(
        p.astype(v.dtype), v, (((1,), (0,)), ((), ())),
        preferred_element_type=jnp.float32)
    m_sc[...] = m_new

    @pl.when(kv_idx == pl.num_programs(3) - 1)
    def _finalize():
        inv_l = pl.reciprocal(l_sc[...], approx=True)          # EUP, ~free
        o_ref[0, 0] = (acc_sc[...] * inv_l).astype(o_ref.dtype)


def attention(q, k, v, mask=None, *, block_q=128, block_k=128):
    """scaled_dot_product_attention(q, k, v, mask) for q/k/v of shape [B, H, N, Dh].

    mask: optional per-key mask, shape [B, Nk] (or [B, 1, Nk]).
          bool  -> True means "attend" (SDPA boolean semantics)
          float -> additive bias (use finite large-negative values).
    """
    # TODO(synk): general broadcastable [*, Nq, Nk] attn_mask shapes are not
    # supported; only per-key masks (the usage pattern in the matcher module).
    assert q.ndim == 4, "expected q/k/v as [B, H, N, Dh]"
    assert block_q % 8 == 0 and block_k % 128 == 0

    orig_dtype = q.dtype
    B, H, Nq, Dh = q.shape
    _, _, Nk, _ = k.shape
    assert k.shape == (B, H, Nk, Dh) and v.shape == (B, H, Nk, Dh)
    scale = float(Dh) ** -0.5               # SDPA default 1/sqrt(head_dim)

    def rnd(x, m):
        return -(-x // m) * m

    bq, bk = block_q, block_k
    nq_pad, nk_pad = rnd(Nq, bq), rnd(Nk, bk)
    dh_pad = rnd(Dh, 128)                   # lane-dense loads / stores

    # bf16 into the MXU, f32 accumulation (perf feedback); pad to tile multiples.
    qp = jnp.pad(q.astype(jnp.bfloat16),
                 ((0, 0), (0, 0), (0, nq_pad - Nq), (0, dh_pad - Dh)))
    kp = jnp.pad(k.astype(jnp.bfloat16),
                 ((0, 0), (0, 0), (0, nk_pad - Nk), (0, dh_pad - Dh)))
    vp = jnp.pad(v.astype(jnp.bfloat16),
                 ((0, 0), (0, 0), (0, nk_pad - Nk), (0, dh_pad - Dh)))

    # Key mask -> one additive f32 row per batch: [B, 1, Nk]. Never a
    # [B, H, Nq, Nk] tensor.
    if mask is None:
        bias = jnp.zeros((B, 1, Nk), jnp.float32)
    else:
        m = jnp.asarray(mask)
        assert m.shape in ((B, Nk), (B, 1, Nk)), m.shape
        m = m.reshape(B, 1, Nk)
        if m.dtype == jnp.bool_:
            bias = jnp.where(m, 0.0, _NEG_INF).astype(jnp.float32)
        else:
            bias = m.astype(jnp.float32)
    bias = jnp.pad(bias, ((0, 0), (0, 0), (0, nk_pad - Nk)),
                   constant_values=_NEG_INF)    # padded keys never attended

    grid = (B, H, nq_pad // bq, nk_pad // bk)

    bias_spec = pl.BlockSpec((1, 1, bk), lambda b, h, i, j: (b, 0, j))
    q_spec = pl.BlockSpec((1, 1, bq, dh_pad), lambda b, h, i, j: (b, h, i, 0))
    kv_spec = pl.BlockSpec((1, 1, bk, dh_pad), lambda b, h, i, j: (b, h, j, 0))
    out_spec = pl.BlockSpec((1, 1, bq, dh_pad), lambda b, h, i, j: (b, h, i, 0))

    itemsize = jnp.dtype(orig_dtype).itemsize
    cost = pl.CostEstimate(
        flops=int(4 * B * H * Nq * Nk * Dh),          # two matmuls
        transcendentals=int(B * H * Nq * Nk),          # exp in softmax
        bytes_accessed=int(2 * (qp.size + kp.size + vp.size)
                           + 4 * bias.size
                           + B * H * nq_pad * dh_pad * itemsize))

    out = pl.pallas_call(
        functools.partial(_flash_attn_kernel, scale=scale),
        out_shape=jax.ShapeDtypeStruct((B, H, nq_pad, dh_pad), orig_dtype),
        grid=grid,
        in_specs=[bias_spec, q_spec, kv_spec, kv_spec],
        out_specs=out_spec,
        scratch_shapes=[
            pltpu.VMEM((bq, 1), jnp.float32),        # running max
            pltpu.VMEM((bq, 1), jnp.float32),        # running sum
            pltpu.VMEM((bq, dh_pad), jnp.float32),   # output accumulator
        ],
        compiler_params=pltpu.CompilerParams(
            dimension_semantics=("parallel", "parallel", "parallel",
                                 "arbitrary")),
        cost_estimate=cost,
    )(bias, qp, kp, vp)

    return out[:, :, :Nq, :Dh]


def reference(q, k, v, mask=None):
    """Plain-JAX transcription of the PyTorch forward, for verification."""
    scale = q.shape[-1] ** -0.5
    s = jnp.einsum("bhid,bhjd->bhij", q, k,
                   precision=jax.lax.Precision.HIGHEST) * scale
    if mask is not None:
        s = jnp.where(mask[:, None, None, :], s, -jnp.inf)
    p = jax.nn.softmax(s, axis=-1)
    return jnp.einsum("bhij,bhjd->bhid", p, v,
                      precision=jax.lax.Precision.HIGHEST)


if __name__ == "__main__":
    key = jax.random.PRNGKey(0)
    kq, kk, kv = jax.random.split(key, 3)

    # Small but tiling-exercising shapes: 2 q-tiles, 2 k-tiles, padding on both
    # sequence dims and on the head dim (64 -> 128).
    B, H, Nq, Nk, Dh = 2, 2, 200, 168, 64
    q = jax.random.normal(kq, (B, H, Nq, Dh), jnp.float32)
    k = jax.random.normal(kk, (B, H, Nk, Dh), jnp.float32)
    v = jax.random.normal(kv, (B, H, Nk, Dh), jnp.float32)
    # key-side boolean mask: batch 0 all valid, batch 1 masks its last 40 keys
    mask = jnp.ones((B, Nk), dtype=jnp.bool_).at[1, Nk - 40:].set(False)

    out = attention(q, k, v, mask)
    out_nomask = attention(q, k, v, None)
    jax.block_until_ready((out, out_nomask))

    ref = reference(q, k, v, mask)
    ref_nomask = reference(q, k, v, None)

    assert out.shape == (B, H, Nq, Dh)
    assert out.dtype == q.dtype
    err = float(jnp.max(jnp.abs(out - ref)))
    err_nm = float(jnp.max(jnp.abs(out_nomask - ref_nomask)))
    # bf16 MXU inputs with f32 accumulation vs. f32 reference.
    assert err < 2e-2, err
    assert err_nm < 2e-2, err_nm
    print("KERNEL_OK")
</pallas_src>

<mosaic_0001>
module attributes {stable_mosaic.version = 11 : i64} {
  func.func @_flash_attn_kernel(%arg0: i32, %arg1: i32, %arg2: i32, %arg3: i32, %arg4: memref<1x1x128xf32, #tpu.memory_space<vmem>>, %arg5: memref<1x1x128x128xbf16, #tpu.memory_space<vmem>>, %arg6: memref<1x1x128x128xbf16, #tpu.memory_space<vmem>>, %arg7: memref<1x1x128x128xbf16, #tpu.memory_space<vmem>>, %arg8: memref<1x1x128x128xf32, #tpu.memory_space<vmem>>, %arg9: memref<128x1xf32, #tpu.memory_space<vmem>>, %arg10: memref<128x1xf32, #tpu.memory_space<vmem>>, %arg11: memref<128x128xf32, #tpu.memory_space<vmem>>) attributes {dimension_semantics = [#tpu.dimension_semantics<parallel>, #tpu.dimension_semantics<parallel>, #tpu.dimension_semantics<parallel>, #tpu.dimension_semantics<arbitrary>], iteration_bounds = array<i64: 2, 2, 2, 2>, scalar_prefetch = 0 : i64, scratch_operands = 3 : i64, tpu.core_type = #tpu.core_type<tc>, window_params = [{transform_indices = @transform_0, window_bounds = array<i64: 1, 1, 128>}, {transform_indices = @transform_1, window_bounds = array<i64: 1, 1, 128, 128>}, {transform_indices = @transform_2, window_bounds = array<i64: 1, 1, 128, 128>}, {transform_indices = @transform_3, window_bounds = array<i64: 1, 1, 128, 128>}, {transform_indices = @transform_4, window_bounds = array<i64: 1, 1, 128, 128>}]} {
    %c0_i32 = arith.constant 0 : i32
    %0 = arith.cmpi eq, %arg3, %c0_i32 : i32
    %1 = arith.extui %0 : i1 to i32
    %c0_i32_0 = arith.constant 0 : i32
    %2 = arith.cmpi ne, %1, %c0_i32_0 : i32
    scf.if %2 {
      %cst_32 = arith.constant -1.000000e+30 : f32
      %42 = vector.broadcast %cst_32 : f32 to vector<128x1xf32>
      %c0_33 = arith.constant 0 : index
      %c0_34 = arith.constant 0 : index
      %43 = vector.load %arg9[%c0_33, %c0_34] : memref<128x1xf32, #tpu.memory_space<vmem>>, vector<128x1xf32>
      tpu.vector_store %arg9[%c0_33, %c0_34], %42 {strides = array<i32>} : memref<128x1xf32, #tpu.memory_space<vmem>>, vector<128x1xf32>,
      %cst_35 = arith.constant 0.000000e+00 : f32
      %44 = vector.broadcast %cst_35 : f32 to vector<128x1xf32>
      %c0_36 = arith.constant 0 : index
      %c0_37 = arith.constant 0 : index
      %45 = vector.load %arg10[%c0_36, %c0_37] : memref<128x1xf32, #tpu.memory_space<vmem>>, vector<128x1xf32>
      tpu.vector_store %arg10[%c0_36, %c0_37], %44 {strides = array<i32>} : memref<128x1xf32, #tpu.memory_space<vmem>>, vector<128x1xf32>,
      %cst_38 = arith.constant 0.000000e+00 : f32
      %46 = vector.broadcast %cst_38 : f32 to vector<128x128xf32>
      %c0_39 = arith.constant 0 : index
      %c0_40 = arith.constant 0 : index
      %47 = vector.load %arg11[%c0_39, %c0_40] : memref<128x128xf32, #tpu.memory_space<vmem>>, vector<128x128xf32>
      tpu.vector_store %arg11[%c0_39, %c0_40], %46 {strides = array<i32>} : memref<128x128xf32, #tpu.memory_space<vmem>>, vector<128x128xf32>,
    } else {
    }
    %c0 = arith.constant 0 : index
    %c0_1 = arith.constant 0 : index
    %c0_2 = arith.constant 0 : index
    %c0_3 = arith.constant 0 : index
    %3 = vector.load %arg5[%c0, %c0_1, %c0_2, %c0_3] : memref<1x1x128x128xbf16, #tpu.memory_space<vmem>>, vector<1x1x128x128xbf16>
    %4 = vector.shape_cast %3 : vector<1x1x128x128xbf16> to vector<128x128xbf16>
    %c0_4 = arith.constant 0 : index
    %c0_5 = arith.constant 0 : index
    %c0_6 = arith.constant 0 : index
    %c0_7 = arith.constant 0 : index
    %5 = vector.load %arg6[%c0_4, %c0_5, %c0_6, %c0_7] : memref<1x1x128x128xbf16, #tpu.memory_space<vmem>>, vector<1x1x128x128xbf16>
    %6 = vector.shape_cast %5 : vector<1x1x128x128xbf16> to vector<128x128xbf16>
    %c0_8 = arith.constant 0 : index
    %c0_9 = arith.constant 0 : index
    %c0_10 = arith.constant 0 : index
    %c0_11 = arith.constant 0 : index
    %7 = vector.load %arg7[%c0_8, %c0_9, %c0_10, %c0_11] : memref<1x1x128x128xbf16, #tpu.memory_space<vmem>>, vector<1x1x128x128xbf16>
    %8 = vector.shape_cast %7 : vector<1x1x128x128xbf16> to vector<128x128xbf16>
    %cst = arith.constant dense<0.000000e+00> : vector<128x128xf32>
    %9 = tpu.matmul %4, %6, %cst {dimension_numbers = #tpu.dot_dimension_numbers<[1], [1], [0], [0], [0, 0, 1, 0], [], []>} : vector<128x128xbf16>, vector<128x128xbf16>, vector<128x128xf32> -> vector<128x128xf32>
    %cst_12 = arith.constant 1.250000e-01 : f32
    %10 = vector.broadcast %cst_12 : f32 to vector<128x128xf32>
    %11 = arith.mulf %9, %10 : vector<128x128xf32>
    %c0_13 = arith.constant 0 : index
    %c0_14 = arith.constant 0 : index
    %c0_15 = arith.constant 0 : index
    %12 = vector.load %arg4[%c0_13, %c0_14, %c0_15] : memref<1x1x128xf32, #tpu.memory_space<vmem>>, vector<1x1x128xf32>
    %13 = vector.shape_cast %12 : vector<1x1x128xf32> to vector<1x128xf32>
    %14 = vector.broadcast %13 : vector<1x128xf32> to vector<128x128xf32>
    %15 = arith.addf %11, %14 : vector<128x128xf32>
    %c0_16 = arith.constant 0 : index
    %c0_17 = arith.constant 0 : index
    %16 = vector.load %arg9[%c0_16, %c0_17] : memref<128x1xf32, #tpu.memory_space<vmem>>, vector<128x1xf32>
    %cst_18 = arith.constant dense<0xFF800000> : vector<128xf32>
    %17 = vector.multi_reduction <maximumf>, %15, %cst_18 [1] : vector<128x128xf32> to vector<128xf32>
    %18 = vector.shape_cast %17 : vector<128xf32> to vector<128x1xf32>
    %19 = arith.maximumf %16, %18 : vector<128x1xf32>
    %20 = arith.subf %16, %19 : vector<128x1xf32>
    %21 = math.exp %20 : vector<128x1xf32>
    %22 = vector.broadcast %19 : vector<128x1xf32> to vector<128x128xf32>
    %23 = arith.subf %15, %22 : vector<128x128xf32>
    %24 = math.exp %23 : vector<128x128xf32>
    %c0_19 = arith.constant 0 : index
    %c0_20 = arith.constant 0 : index
    %25 = vector.load %arg10[%c0_19, %c0_20] : memref<128x1xf32, #tpu.memory_space<vmem>>, vector<128x1xf32>
    %26 = arith.mulf %21, %25 : vector<128x1xf32>
    %cst_21 = arith.constant dense<0.000000e+00> : vector<128xf32>
    %27 = vector.multi_reduction <add>, %24, %cst_21 [1] : vector<128x128xf32> to vector<128xf32>
    %28 = vector.shape_cast %27 : vector<128xf32> to vector<128x1xf32>
    %29 = arith.addf %26, %28 : vector<128x1xf32>
    %c0_22 = arith.constant 0 : index
    %c0_23 = arith.constant 0 : index
    %30 = vector.load %arg10[%c0_22, %c0_23] : memref<128x1xf32, #tpu.memory_space<vmem>>, vector<128x1xf32>
    tpu.vector_store %arg10[%c0_22, %c0_23], %29 {strides = array<i32>} : memref<128x1xf32, #tpu.memory_space<vmem>>, vector<128x1xf32>,
    %c0_24 = arith.constant 0 : index
    %c0_25 = arith.constant 0 : index
    %31 = vector.load %arg11[%c0_24, %c0_25] : memref<128x128xf32, #tpu.memory_space<vmem>>, vector<128x128xf32>
    %32 = vector.broadcast %21 : vector<128x1xf32> to vector<128x128xf32>
    %33 = arith.mulf %32, %31 : vector<128x128xf32>
    %34 = arith.truncf %24 : vector<128x128xf32> to vector<128x128xbf16>
    %cst_26 = arith.constant dense<0.000000e+00> : vector<128x128xf32>
    %35 = tpu.matmul %34, %8, %cst_26 {dimension_numbers = #tpu.dot_dimension_numbers<[1], [0], [0], [1], [0, 0, 1, 1], [], []>} : vector<128x128xbf16>, vector<128x128xbf16>, vector<128x128xf32> -> vector<128x128xf32>
    %36 = arith.addf %33, %35 : vector<128x128xf32>
    %c0_27 = arith.constant 0 : index
    %c0_28 = arith.constant 0 : index
    %37 = vector.load %arg11[%c0_27, %c0_28] : memref<128x128xf32, #tpu.memory_space<vmem>>, vector<128x128xf32>
    tpu.vector_store %arg11[%c0_27, %c0_28], %36 {strides = array<i32>} : memref<128x128xf32, #tpu.memory_space<vmem>>, vector<128x128xf32>,
    %c0_29 = arith.constant 0 : index
    %c0_30 = arith.constant 0 : index
    %38 = vector.load %arg9[%c0_29, %c0_30] : memref<128x1xf32, #tpu.memory_space<vmem>>, vector<128x1xf32>
    tpu.vector_store %arg9[%c0_29, %c0_30], %19 {strides = array<i32>} : memref<128x1xf32, #tpu.memory_space<vmem>>, vector<128x1xf32>,
    %c1_i32 = arith.constant 1 : i32
    %39 = arith.cmpi eq, %arg3, %c1_i32 : i32
    %40 = arith.extui %39 : i1 to i32
    %c0_i32_31 = arith.constant 0 : i32
    %41 = arith.cmpi ne, %40, %c0_i32_31 : i32
    scf.if %41 {
      %c0_32 = arith.constant 0 : index
      %c0_33 = arith.constant 0 : index
      %42 = vector.load %arg10[%c0_32, %c0_33] : memref<128x1xf32, #tpu.memory_space<vmem>>, vector<128x1xf32>
      %43 = tpu.reciprocal %42 {approx = true} : vector<128x1xf32> -> vector<128x1xf32>
      %c0_34 = arith.constant 0 : index
      %c0_35 = arith.constant 0 : index
      %44 = vector.load %arg11[%c0_34, %c0_35] : memref<128x128xf32, #tpu.memory_space<vmem>>, vector<128x128xf32>
      %45 = vector.broadcast %43 : vector<128x1xf32> to vector<128x128xf32>
      %46 = arith.mulf %44, %45 : vector<128x128xf32>
      %c0_36 = arith.constant 0 : index
      %c0_37 = arith.constant 0 : index
      %c0_38 = arith.constant 0 : index
      %c0_39 = arith.constant 0 : index
      %47 = vector.load %arg8[%c0_36, %c0_37, %c0_38, %c0_39] : memref<1x1x128x128xf32, #tpu.memory_space<vmem>>, vector<1x1x128x128xf32>
      %48 = vector.shape_cast %47 : vector<1x1x128x128xf32> to vector<128x128xf32>
      %49 = vector.shape_cast %46 : vector<128x128xf32> to vector<1x1x128x128xf32>
      tpu.vector_store %arg8[%c0_36, %c0_37, %c0_38, %c0_39], %49 {strides = array<i32>} : memref<1x1x128x128xf32, #tpu.memory_space<vmem>>, vector<1x1x128x128xf32>,
    } else {
    }
    return
  }
  func.func @transform_0(%arg0: i32, %arg1: i32, %arg2: i32, %arg3: i32) -> (i32, i32, i32) {
    %c0_i32 = arith.constant 0 : i32
    %c0_i32_0 = arith.constant 0 : i32
    return %arg0, %c0_i32, %arg3 : i32, i32, i32
  }
  func.func @transform_1(%arg0: i32, %arg1: i32, %arg2: i32, %arg3: i32) -> (i32, i32, i32, i32) {
    %c0_i32 = arith.constant 0 : i32
    %c0_i32_0 = arith.constant 0 : i32
    return %arg0, %arg1, %arg2, %c0_i32 : i32, i32, i32, i32
  }
  func.func @transform_2(%arg0: i32, %arg1: i32, %arg2: i32, %arg3: i32) -> (i32, i32, i32, i32) {
    %c0_i32 = arith.constant 0 : i32
    %c0_i32_0 = arith.constant 0 : i32
    return %arg0, %arg1, %arg3, %c0_i32 : i32, i32, i32, i32
  }
  func.func @transform_3(%arg0: i32, %arg1: i32, %arg2: i32, %arg3: i32) -> (i32, i32, i32, i32) {
    %c0_i32 = arith.constant 0 : i32
    %c0_i32_0 = arith.constant 0 : i32
    return %arg0, %arg1, %arg3, %c0_i32 : i32, i32, i32, i32
  }
  func.func @transform_4(%arg0: i32, %arg1: i32, %arg2: i32, %arg3: i32) -> (i32, i32, i32, i32) {
    %c0_i32 = arith.constant 0 : i32
    %c0_i32_0 = arith.constant 0 : i32
    return %arg0, %arg1, %arg2, %c0_i32 : i32, i32, i32, i32
  }
}

</mosaic_0001>

<llo_original>
// kernel: tpu_custom_call.1
$region0: #{tpu_custom_call.1}
  #allocation0 [shape = 'u32[]', space=smem, size = 0x4, offset = 0x4, fixed_abs, tag = 'smem constant byte address 0x4 - core index']
  #allocation1 [shape = 'u32[72,128]{1,0:T(1,128)}', space=vmem, size = 0x9000, scoped, tag = 'internal scratch']
  #allocation2 [shape = 'f32[128,1]{1,0:T(8,128)}', space=vmem, size = 0x10000, scoped, tag = 'scratch operand']
  #allocation3 [shape = 'f32[128,1]{1,0:T(8,128)}', space=vmem, size = 0x10000, scoped, tag = 'scratch operand']
  #allocation4 [shape = 'f32[128,128]{1,0:T(8,128)}', space=vmem, size = 0x10000, scoped, tag = 'scratch operand']
  %s0 = inlined_call_operand.hbm [shape: f32[2,1,256], index: 0, kind: input, shape index: {}]
  %s1 = inlined_call_operand.hbm [shape: bf16[2,2,256,128], index: 1, kind: input, shape index: {}]
  %s2 = inlined_call_operand.hbm [shape: bf16[2,2,256,128], index: 2, kind: input, shape index: {}]
  %s3 = inlined_call_operand.hbm [shape: bf16[2,2,256,128], index: 3, kind: input, shape index: {}]
  %s4 = inlined_call_operand.hbm [shape: f32[2,2,256,128], index: 4, kind: output, shape index: {}]
  %s5 = sld [smem:[#allocation0]]
  $region73: #{tpu_custom_call.1} parent=0
    _
  %s7 = ssub.s32 1, %s5
  %s8 = scalar_select 0, %s7, %s5
  $region1: #{tpu_custom_call.1} parent=0
    #allocation5 [shape = 'u8[1024]{0}', space=vmem, size = 0x400, scoped, tag = 'input window, operand 0']
    #allocation6 [shape = 's32[2]{0}', space=sflag, size = 0x8, scoped, tag = 'scoped memory for tpu_custom_call.1']
    #allocation7 [shape = 's32[2]{0}', space=sflag, size = 0x8, scoped, tag = 'scoped memory for tpu_custom_call.1']
    #allocation8 [shape = 'u8[65536]{0}', space=vmem, size = 0x10000, scoped, tag = 'input window, operand 1']
    #allocation9 [shape = 's32[2]{0}', space=sflag, size = 0x8, scoped, tag = 'scoped memory for tpu_custom_call.1']
    #allocation10 [shape = 'u8[65536]{0}', space=vmem, size = 0x10000, scoped, tag = 'input window, operand 2']
    #allocation11 [shape = 'u8[65536]{0}', space=vmem, size = 0x10000, scoped, tag = 'input window, operand 3']
    #allocation12 [shape = 's32[2]{0}', space=sflag, size = 0x8, scoped, tag = 'scoped memory for tpu_custom_call.1']
    #allocation13 [shape = 'u8[131072]{0}', space=vmem, size = 0x20000, scoped, tag = 'output window, operand 0']
    %9 = vsyncpa [#allocation6], 0
    %s10 = scalar_lea.sflag [#allocation6], 1
    %11 = vsyncpa %s10, 0
    %12 = vsyncpa [#allocation9], 0
    %s13 = scalar_lea.sflag [#allocation9], 1
    %14 = vsyncpa %s13, 0
    %15 = vsyncpa [#allocation12], 0
    %s16 = scalar_lea.sflag [#allocation12], 1
    %17 = vsyncpa %s16, 0
    %18 = vsyncpa [#allocation7], 0
    %s19 = scalar_lea.sflag [#allocation7], 1
    %20 = vsyncpa %s19, 0
    loop: start=0, step=1, limit=18
    $region2: #{tpu_custom_call.1} parent=1 // loop_pre_header
      _
    $region3: #{tpu_custom_call.1} parent=1 // loop_header
      %s22 = sphi 0, %s26
      %p23 = scmp.ge.s32.totalorder %s22, 18
      %s29 = sphi 0, %s55
      %s30 = sphi 0, %s51
      %s31 = sphi 0, %s47
      %s32 = sphi 0, %s43
      %s33 = sphi 0, %s29
      %s34 = sphi 0, %s30
      %s35 = sphi 0, %s31
      %s36 = sphi 0, %s32
      %s37 = sphi 0, %s33
      %s38 = sphi 0, %s34
      %s39 = sphi 0, %s35
      %s40 = sphi 0, %s36
      %s60 = sphi 0, %s62
      %s63 = sphi 0, %s60
      %s64 = sphi 0, %s63
      %s80 = sphi 0, %s64
      %s90 = sphi 0, %s92
      %s93 = sphi 0, %s90
      %s94 = sphi 0, %s93
      %s110 = sphi 0, %s94
      %s120 = sphi 0, %s122
      %s123 = sphi 0, %s120
      %s124 = sphi 0, %s123
      %s140 = sphi 0, %s124
      %s150 = sphi 0, %s152
      %s153 = sphi 0, %s150
      %s154 = sphi 0, %s153
      %s170 = sphi 0, %s154
      %s180 = sphi 0, %s182
      %s183 = sphi 0, %s180
      %s184 = sphi 0, %s183
      %s200 = sphi 0, %s184
    $region4: #{tpu_custom_call.1} parent=1 // loop_header_branch
      %25 = sbr.rel (%p23) target = $region8
    $region5: #{tpu_custom_call.1} parent=1 // loop_body
      %s27 = ssub.s32 %s22, 1
      %s28 = ssub.s32 %s22, 2
      %s41 = sadd.s32 1, %s32
      %p42 = scmp.ge.s32.totalorder %s41, 2
      %s43 = scalar_select %p42, 0, %s41
      %s44 = sadd.s32 1, %s31
      %s45 = scalar_select %p42, %s44, %s31
      %p46 = scmp.ge.s32.totalorder %s45, 2
      %s47 = scalar_select %p46, 0, %s45
      %s48 = sadd.s32 1, %s30
      %s49 = scalar_select %p46, %s48, %s30
      %p50 = scmp.ge.s32.totalorder %s49, 2
      %s51 = scalar_select %p50, 0, %s49
      %s52 = sadd.s32 1, %s29
      %s53 = scalar_select %p50, %s52, %s29
      %p54 = scmp.ge.s32.totalorder %s53, 2
      %s55 = scalar_select %p54, 0, %s53
      %s56 = ssub.s32 %s29, %s55
      %s57 = ssub.s32 %s32, %s43
      %s58 = sor.u32 %s56, %s57
      %p59 = scmp.eq.s32.totalorder %s58, 0
      %s61 = sadd.s32 %s60, 1
      %s62 = scalar_select %p59, %s60, %s61
      %p65 = pneg %p59
      %p66 = scmp.eq.s32.totalorder %s22, 15
      %p67 = por %p65, %p66
      %p68 = scmp.ne.s32.totalorder %s60, %s63
      %p69 = scmp.eq.s32.totalorder %s22, 0
      %p70 = por %p68, %p69
      %p71 = scmp.ne.s32.totalorder %s60, %s63
      %p72 = scmp.eq.s32.totalorder %s27, 15
      %p73 = por %p71, %p72
      %p74 = scmp.ne.s32.totalorder %s63, %s64
      %p75 = scmp.eq.s32.totalorder %s27, 0
      %p76 = por %p74, %p75
      %p77 = scmp.ne.s32.totalorder %s63, %s64
      %p78 = scmp.eq.s32.totalorder %s28, 15
      %p79 = por %p77, %p78
      %p81 = scmp.ne.s32.totalorder %s64, %s80
      %p82 = scmp.eq.s32.totalorder %s28, 0
      %p83 = por %p81, %p82
      %s84 = ssub.s32 %s29, %s55
      %s85 = ssub.s32 %s30, %s51
      %s86 = sor.u32 %s84, %s85
      %s87 = ssub.s32 %s31, %s47
      %s88 = sor.u32 %s86, %s87
      %p89 = scmp.eq.s32.totalorder %s88, 0
      %s91 = sadd.s32 %s90, 1
      %s92 = scalar_select %p89, %s90, %s91
      %p95 = pneg %p89
      %p96 = scmp.eq.s32.totalorder %s22, 15
      %p97 = por %p95, %p96
      %p98 = scmp.ne.s32.totalorder %s90, %s93
      %p99 = scmp.eq.s32.totalorder %s22, 0
      %p100 = por %p98, %p99
      %p101 = scmp.ne.s32.totalorder %s90, %s93
      %p102 = scmp.eq.s32.totalorder %s27, 15
      %p103 = por %p101, %p102
      %p104 = scmp.ne.s32.totalorder %s93, %s94
      %p105 = scmp.eq.s32.totalorder %s27, 0
      %p106 = por %p104, %p105
      %p107 = scmp.ne.s32.totalorder %s93, %s94
      %p108 = scmp.eq.s32.totalorder %s28, 15
      %p109 = por %p107, %p108
      %p111 = scmp.ne.s32.totalorder %s94, %s110
      %p112 = scmp.eq.s32.totalorder %s28, 0
      %p113 = por %p111, %p112
      %s114 = ssub.s32 %s29, %s55
      %s115 = ssub.s32 %s30, %s51
      %s116 = sor.u32 %s114, %s115
      %s117 = ssub.s32 %s32, %s43
      %s118 = sor.u32 %s116, %s117
      %p119 = scmp.eq.s32.totalorder %s118, 0
      %s121 = sadd.s32 %s120, 1
      %s122 = scalar_select %p119, %s120, %s121
      %p125 = pneg %p119
      %p126 = scmp.eq.s32.totalorder %s22, 15
      %p127 = por %p125, %p126
      %p128 = scmp.ne.s32.totalorder %s120, %s123
      %p129 = scmp.eq.s32.totalorder %s22, 0
      %p130 = por %p128, %p129
      %p131 = scmp.ne.s32.totalorder %s120, %s123
      %p132 = scmp.eq.s32.totalorder %s27, 15
      %p133 = por %p131, %p132
      %p134 = scmp.ne.s32.totalorder %s123, %s124
      %p135 = scmp.eq.s32.totalorder %s27, 0
      %p136 = por %p134, %p135
      %p137 = scmp.ne.s32.totalorder %s123, %s124
      %p138 = scmp.eq.s32.totalorder %s28, 15
      %p139 = por %p137, %p138
      %p141 = scmp.ne.s32.totalorder %s124, %s140
      %p142 = scmp.eq.s32.totalorder %s28, 0
      %p143 = por %p141, %p142
      %s144 = ssub.s32 %s29, %s55
      %s145 = ssub.s32 %s30, %s51
      %s146 = sor.u32 %s144, %s145
      %s147 = ssub.s32 %s32, %s43
      %s148 = sor.u32 %s146, %s147
      %p149 = scmp.eq.s32.totalorder %s148, 0
      %s151 = sadd.s32 %s150, 1
      %s152 = scalar_select %p149, %s150, %s151
      %p155 = pneg %p149
      %p156 = scmp.eq.s32.totalorder %s22, 15
      %p157 = por %p155, %p156
      %p158 = scmp.ne.s32.totalorder %s150, %s153
      %p159 = scmp.eq.s32.totalorder %s22, 0
      %p160 = por %p158, %p159
      %p161 = scmp.ne.s32.totalorder %s150, %s153
      %p162 = scmp.eq.s32.totalorder %s27, 15
      %p163 = por %p161, %p162
      %p164 = scmp.ne.s32.totalorder %s153, %s154
      %p165 = scmp.eq.s32.totalorder %s27, 0
      %p166 = por %p164, %p165
      %p167 = scmp.ne.s32.totalorder %s153, %s154
      %p168 = scmp.eq.s32.totalorder %s28, 15
      %p169 = por %p167, %p168
      %p171 = scmp.ne.s32.totalorder %s154, %s170
      %p172 = scmp.eq.s32.totalorder %s28, 0
      %p173 = por %p171, %p172
      %s174 = ssub.s32 %s29, %s55
      %s175 = ssub.s32 %s30, %s51
      %s176 = sor.u32 %s174, %s175
      %s177 = ssub.s32 %s31, %s47
      %s178 = sor.u32 %s176, %s177
      %p179 = scmp.eq.s32.totalorder %s178, 0
      %s181 = sadd.s32 %s180, 1
      %s182 = scalar_select %p179, %s180, %s181
      %p185 = pneg %p179
      %p186 = scmp.eq.s32.totalorder %s22, 15
      %p187 = por %p185, %p186
      %p188 = scmp.ne.s32.totalorder %s180, %s183
      %p189 = scmp.eq.s32.totalorder %s22, 0
      %p190 = por %p188, %p189
      %p191 = scmp.ne.s32.totalorder %s180, %s183
      %p192 = scmp.eq.s32.totalorder %s27, 15
      %p193 = por %p191, %p192
      %p194 = scmp.ne.s32.totalorder %s183, %s184
      %p195 = scmp.eq.s32.totalorder %s27, 0
      %p196 = por %p194, %p195
      %p197 = scmp.ne.s32.totalorder %s183, %s184
      %p198 = scmp.eq.s32.totalorder %s28, 15
      %p199 = por %p197, %p198
      %p201 = scmp.ne.s32.totalorder %s184, %s200
      %p202 = scmp.eq.s32.totalorder %s28, 0
      %p203 = por %p201, %p202
      %p204 = scmp.le.s32.totalorder 1, %s22
      %p205 = scmp.lt.s32.totalorder %s22, 17
      %p206 = pnand %p204, %p205
      %p207 = pneg %p206
      // Predicated region
      $region9: #{tpu_custom_call.1} parent=5 // pred_check
        _
      $region10: #{tpu_custom_call.1} parent=5 // pred_check_branch
        %209 = sbr.rel (%p206) target = $region12
      $region11: #{tpu_custom_call.1} parent=5 // pred_region
        %s210 = ssub.s32 %s22, 1
      $region12: #{tpu_custom_call.1} parent=5 // pred_fallthru
        _
      %p211 = scmp.lt.s32.totalorder %s22, 16
      // Predicated region
      $region13: #{tpu_custom_call.1} parent=5 // pred_check
        %p212 = pneg %p211
      $region14: #{tpu_custom_call.1} parent=5 // pred_check_branch
        %214 = sbr.rel (%p212) target = $region16
      $region15: #{tpu_custom_call.1} parent=5 // pred_region
        // Predicated region
        $region17: #{tpu_custom_call.1} parent=15 // pred_check
          %p215 = pneg %p70
        $region18: #{tpu_custom_call.1} parent=15 // pred_check_branch
          %217 = sbr.rel (%p215) target = $region20
        $region19: #{tpu_custom_call.1} parent=15 // pred_region
          %s218 = sand.u32 %s60, 1
          %s219 = scalar_lea.sflag [#allocation6], %s218
          %s220 = sand.u32 %s60, 1
          %s221 = scalar_lea.vmem [#allocation5], %s220
          %223 = vsyncadd %s219, 0
          %s224 = smul.addr %s29, 2
          %s225 = sadd.s32 %s32, %s224
          %s226 = scalar_lea.hbm %s0, %s225
          %s228 = sshll.u32 %s226, 4
          %s229 = int_to_ptr.hbm [resolvable:$true] %s228
          %s230 = sshll.u32 %s221, 4
          %s231 = int_to_ptr.vmem [resolvable:$true] %s230
          %233 = dma.hbm_to_vmem [thread:$0]  %s229, 16, %s231, %s219
        $region20: #{tpu_custom_call.1} parent=15 // pred_fallthru
          _
        // Predicated region
        $region21: #{tpu_custom_call.1} parent=15 // pred_check
          %p234 = pneg %p100
        $region22: #{tpu_custom_call.1} parent=15 // pred_check_branch
          %236 = sbr.rel (%p234) target = $region24
        $region23: #{tpu_custom_call.1} parent=15 // pred_region
          %s237 = sand.u32 %s22, 1
          %s238 = scalar_lea.sflag [#allocation9], %s237
          %s239 = sand.u32 %s90, 1
          %s240 = smul.addr %s239, 64
          %s241 = scalar_lea.vmem [#allocation8], %s240
          %s242 = smul.u32 16, %s31
          %244 = vsyncadd %s238, 0
          %s245 = smul.addr %s30, 32
          %s246 = sadd.s32 %s242, %s245
          %s247 = smul.addr %s29, 64
          %s248 = sadd.s32 %s246, %s247
          %s249 = smul.addr %s248, 4
          %s250 = scalar_lea.hbm %s1, %s249
          %s251 = sshll.u32 %s250, 4
          %s252 = int_to_ptr.hbm [resolvable:$true] %s251
          %s253 = sshll.u32 %s241, 4
          %s254 = int_to_ptr.vmem [resolvable:$true] %s253
          %259 = dma.hbm_to_vmem [thread:$0]  %s252, 1024, %s254, %s238, 64, 64, 4
        $region24: #{tpu_custom_call.1} parent=15 // pred_fallthru
          _
        // Predicated region
        $region25: #{tpu_custom_call.1} parent=15 // pred_check
          %p260 = pneg %p130
        $region26: #{tpu_custom_call.1} parent=15 // pred_check_branch
          %262 = sbr.rel (%p260) target = $region28
        $region27: #{tpu_custom_call.1} parent=15 // pred_region
          %s263 = sand.u32 %s22, 1
          %s264 = scalar_lea.sflag [#allocation9], %s263
          %s265 = sand.u32 %s120, 1
          %s266 = smul.addr %s265, 64
          %s267 = scalar_lea.vmem [#allocation10], %s266
          %s268 = smul.u32 16, %s32
          %270 = vsyncadd %s264, 0
          %s271 = smul.addr %s30, 32
          %s272 = sadd.s32 %s268, %s271
          %s273 = smul.addr %s29, 64
          %s274 = sadd.s32 %s272, %s273
          %s275 = smul.addr %s274, 4
          %s276 = scalar_lea.hbm %s2, %s275
          %s277 = sshll.u32 %s276, 4
          %s278 = int_to_ptr.hbm [resolvable:$true] %s277
          %s279 = sshll.u32 %s267, 4
          %s280 = int_to_ptr.vmem [resolvable:$true] %s279
          %285 = dma.hbm_to_vmem [thread:$0]  %s278, 1024, %s280, %s264, 64, 64, 4
        $region28: #{tpu_custom_call.1} parent=15 // pred_fallthru
          _
        // Predicated region
        $region29: #{tpu_custom_call.1} parent=15 // pred_check
          %p286 = pneg %p160
        $region30: #{tpu_custom_call.1} parent=15 // pred_check_branch
          %288 = sbr.rel (%p286) target = $region32
        $region31: #{tpu_custom_call.1} parent=15 // pred_region
          %s289 = sand.u32 %s150, 1
          %s290 = scalar_lea.sflag [#allocation12], %s289
          %s291 = sand.u32 %s150, 1
          %s292 = smul.addr %s291, 64
          %s293 = scalar_lea.vmem [#allocation11], %s292
          %s294 = smul.u32 16, %s32
          %296 = vsyncadd %s290, 0
          %s297 = smul.addr %s30, 32
          %s298 = sadd.s32 %s294, %s297
          %s299 = smul.addr %s29, 64
          %s300 = sadd.s32 %s298, %s299
          %s301 = smul.addr %s300, 4
          %s302 = scalar_lea.hbm %s3, %s301
          %s303 = sshll.u32 %s302, 4
          %s304 = int_to_ptr.hbm [resolvable:$true] %s303
          %s305 = sshll.u32 %s293, 4
          %s306 = int_to_ptr.vmem [resolvable:$true] %s305
          %311 = dma.hbm_to_vmem [thread:$0]  %s304, 1024, %s306, %s290, 64, 64, 4
        $region32: #{tpu_custom_call.1} parent=15 // pred_fallthru
          _
      $region16: #{tpu_custom_call.1} parent=5 // pred_fallthru
        _
      %p312 = scmp.le.s32.totalorder 1, %s22
      %p313 = scmp.lt.s32.totalorder %s22, 17
      %p314 = pnand %p312, %p313
      %p315 = pneg %p314
      // Predicated region
      $region33: #{tpu_custom_call.1} parent=5 // pred_check
        _
      $region34: #{tpu_custom_call.1} parent=5 // pred_check_branch
        %317 = sbr.rel (%p314) target = $region36
      $region35: #{tpu_custom_call.1} parent=5 // pred_region
        %s318 = ssub.s32 %s22, 1
        %s319 = sand.u32 %s63, 1
        %s320 = scalar_lea.sflag [#allocation6], %s319
        %s321 = sand.u32 %s63, 1
        %s322 = scalar_lea.vmem [#allocation5], %s321
        // Predicated region
        $region37: #{tpu_custom_call.1} parent=35 // pred_check
          %p323 = pneg %p76
        $region38: #{tpu_custom_call.1} parent=35 // pred_check_branch
          %325 = sbr.rel (%p323) target = $region40
        $region39: #{tpu_custom_call.1} parent=35 // pred_region
          %327 = dma.done %s320, 16
        $region40: #{tpu_custom_call.1} parent=35 // pred_fallthru
          _
        %s328 = sand.u32 %s27, 1
        %s329 = scalar_lea.sflag [#allocation9], %s328
        %s330 = sand.u32 %s93, 1
        %s331 = smul.addr %s330, 64
        %s332 = scalar_lea.vmem [#allocation8], %s331
        // Predicated region
        $region41: #{tpu_custom_call.1} parent=35 // pred_check
          %p333 = pneg %p106
        $region42: #{tpu_custom_call.1} parent=35 // pred_check_branch
          %335 = sbr.rel (%p333) target = $region44
        $region43: #{tpu_custom_call.1} parent=35 // pred_region
          %337 = dma.done %s329, 1024
        $region44: #{tpu_custom_call.1} parent=35 // pred_fallthru
          _
        %s338 = sand.u32 %s27, 1
        %s339 = scalar_lea.sflag [#allocation9], %s338
        %s340 = sand.u32 %s123, 1
        %s341 = smul.addr %s340, 64
        %s342 = scalar_lea.vmem [#allocation10], %s341
        // Predicated region
        $region45: #{tpu_custom_call.1} parent=35 // pred_check
          %p343 = pneg %p136
        $region46: #{tpu_custom_call.1} parent=35 // pred_check_branch
          %345 = sbr.rel (%p343) target = $region48
        $region47: #{tpu_custom_call.1} parent=35 // pred_region
          %347 = dma.done %s339, 1024
        $region48: #{tpu_custom_call.1} parent=35 // pred_fallthru
          _
        %s348 = sand.u32 %s153, 1
        %s349 = scalar_lea.sflag [#allocation12], %s348
        %s350 = sand.u32 %s153, 1
        %s351 = smul.addr %s350, 64
        %s352 = scalar_lea.vmem [#allocation11], %s351
        // Predicated region
        $region49: #{tpu_custom_call.1} parent=35 // pred_check
          %p353 = pneg %p166
        $region50: #{tpu_custom_call.1} parent=35 // pred_check_branch
          %355 = sbr.rel (%p353) target = $region52
        $region51: #{tpu_custom_call.1} parent=35 // pred_region
          %357 = dma.done %s349, 1024
        $region52: #{tpu_custom_call.1} parent=35 // pred_fallthru
          _
        %s358 = sand.u32 %s63, 1
        %s359 = scalar_lea.sflag [#allocation6], %s358
        %s360 = sand.u32 %s63, 1
        %s361 = scalar_lea.vmem [#allocation5], %s360
        %p362 = pneg %p76
        %p363 = pneg %p73
        %s364 = sand.u32 %s27, 1
        %s365 = scalar_lea.sflag [#allocation9], %s364
        %s366 = sand.u32 %s93, 1
        %s367 = smul.addr %s366, 64
        %s368 = scalar_lea.vmem [#allocation8], %s367
        %p369 = pneg %p106
        %p370 = pneg %p103
        %s371 = sand.u32 %s27, 1
        %s372 = scalar_lea.sflag [#allocation9], %s371
        %s373 = sand.u32 %s123, 1
        %s374 = smul.addr %s373, 64
        %s375 = scalar_lea.vmem [#allocation10], %s374
        %p376 = pneg %p136
        %p377 = pneg %p133
        %s378 = sand.u32 %s153, 1
        %s379 = scalar_lea.sflag [#allocation12], %s378
        %s380 = sand.u32 %s153, 1
        %s381 = smul.addr %s380, 64
        %s382 = scalar_lea.vmem [#allocation11], %s381
        %p383 = pneg %p166
        %p384 = pneg %p163
        %p385 = pneg %p196
        %p386 = pneg %p193
        %s387 = sand.u32 %s183, 1
        %s388 = scalar_lea.sflag [#allocation7], %s387
        %s389 = sand.u32 %s183, 1
        %s390 = smul.addr %s389, 128
        %s391 = scalar_lea.vmem [#allocation13], %s390
        %s392 = smul.u32 16, %s35
        %s393 = smul.u32 16, %s36
        %s394 = smul.u32 16, %s36
        %s395 = smul.u32 16, %s35
        %p396 = scmp.eq.s32.totalorder %s36, 0
        // Predicated region
        $region53: #{tpu_custom_call.1} parent=35 // pred_check
          %p397 = pneg %p396
        $region54: #{tpu_custom_call.1} parent=35 // pred_check_branch
          %399 = sbr.rel (%p397) target = $region56
        $region55: #{tpu_custom_call.1} parent=35 // pred_region
          %vm400 = vcmask 7168
          %401 = vst.msk [vmem:[#allocation2] sm:$0xff] %vm400, -1e+30
          %402 = vst.msk [vmem:[#allocation2 + $0x8] sm:$0xff] %vm400, -1e+30
          %403 = vst.msk [vmem:[#allocation2 + $0x10] sm:$0xff] %vm400, -1e+30
          %404 = vst.msk [vmem:[#allocation2 + $0x18] sm:$0xff] %vm400, -1e+30
          %405 = vst.msk [vmem:[#allocation2 + $0x20] sm:$0xff] %vm400, -1e+30
          %406 = vst.msk [vmem:[#allocation2 + $0x28] sm:$0xff] %vm400, -1e+30
          %407 = vst.msk [vmem:[#allocation2 + $0x30] sm:$0xff] %vm400, -1e+30
          %408 = vst.msk [vmem:[#allocation2 + $0x38] sm:$0xff] %vm400, -1e+30
          %409 = vst.msk [vmem:[#allocation2 + $0x40] sm:$0xff] %vm400, -1e+30
          %410 = vst.msk [vmem:[#allocation2 + $0x48] sm:$0xff] %vm400, -1e+30
          %411 = vst.msk [vmem:[#allocation2 + $0x50] sm:$0xff] %vm400, -1e+30
          %412 = vst.msk [vmem:[#allocation2 + $0x58] sm:$0xff] %vm400, -1e+30
          %413 = vst.msk [vmem:[#allocation2 + $0x60] sm:$0xff] %vm400, -1e+30
          %414 = vst.msk [vmem:[#allocation2 + $0x68] sm:$0xff] %vm400, -1e+30
          %415 = vst.msk [vmem:[#allocation2 + $0x70] sm:$0xff] %vm400, -1e+30
          %416 = vst.msk [vmem:[#allocation2 + $0x78] sm:$0xff] %vm400, -1e+30
          %417 = vst.msk [vmem:[#allocation3] sm:$0xff] %vm400, 0.0
          %418 = vst.msk [vmem:[#allocation3 + $0x8] sm:$0xff] %vm400, 0.0
          %419 = vst.msk [vmem:[#allocation3 + $0x10] sm:$0xff] %vm400, 0.0
          %420 = vst.msk [vmem:[#allocation3 + $0x18] sm:$0xff] %vm400, 0.0
          %421 = vst.msk [vmem:[#allocation3 + $0x20] sm:$0xff] %vm400, 0.0
          %422 = vst.msk [vmem:[#allocation3 + $0x28] sm:$0xff] %vm400, 0.0
          %423 = vst.msk [vmem:[#allocation3 + $0x30] sm:$0xff] %vm400, 0.0
          %424 = vst.msk [vmem:[#allocation3 + $0x38] sm:$0xff] %vm400, 0.0
          %425 = vst.msk [vmem:[#allocation3 + $0x40] sm:$0xff] %vm400, 0.0
          %426 = vst.msk [vmem:[#allocation3 + $0x48] sm:$0xff] %vm400, 0.0
          %427 = vst.msk [vmem:[#allocation3 + $0x50] sm:$0xff] %vm400, 0.0
          %428 = vst.msk [vmem:[#allocation3 + $0x58] sm:$0xff] %vm400, 0.0
          %429 = vst.msk [vmem:[#allocation3 + $0x60] sm:$0xff] %vm400, 0.0
          %430 = vst.msk [vmem:[#allocation3 + $0x68] sm:$0xff] %vm400, 0.0
          %431 = vst.msk [vmem:[#allocation3 + $0x70] sm:$0xff] %vm400, 0.0
          %432 = vst.msk [vmem:[#allocation3 + $0x78] sm:$0xff] %vm400, 0.0
          %433 = vst [vmem:[#allocation4] sm:$0xff] 0.0
          %434 = vst [vmem:[#allocation4 + $0x8] sm:$0xff] 0.0
          %435 = vst [vmem:[#allocation4 + $0x10] sm:$0xff] 0.0
          %436 = vst [vmem:[#allocation4 + $0x18] sm:$0xff] 0.0
          %437 = vst [vmem:[#allocation4 + $0x20] sm:$0xff] 0.0
          %438 = vst [vmem:[#allocation4 + $0x28] sm:$0xff] 0.0
          %439 = vst [vmem:[#allocation4 + $0x30] sm:$0xff] 0.0
          %440 = vst [vmem:[#allocation4 + $0x38] sm:$0xff] 0.0
          %441 = vst [vmem:[#allocation4 + $0x40] sm:$0xff] 0.0
          %442 = vst [vmem:[#allocation4 + $0x48] sm:$0xff] 0.0
          %443 = vst [vmem:[#allocation4 + $0x50] sm:$0xff] 0.0
          %444 = vst [vmem:[#allocation4 + $0x58] sm:$0xff] 0.0
          %445 = vst [vmem:[#allocation4 + $0x60] sm:$0xff] 0.0
          %446 = vst [vmem:[#allocation4 + $0x68] sm:$0xff] 0.0
          %447 = vst [vmem:[#allocation4 + $0x70] sm:$0xff] 0.0
          %448 = vst [vmem:[#allocation4 + $0x78] sm:$0xff] 0.0
        $region56: #{tpu_custom_call.1} parent=35 // pred_fallthru
          _
        %v449 = vld [vmem:[%s332] sm:$0xf]
        %v450 = vld [vmem:[%s332 + $0x4] sm:$0xf]
        %v451 = vld [vmem:[%s332 + $0x8] sm:$0xf]
        %v452 = vld [vmem:[%s332 + $0xc] sm:$0xf]
        %v453 = vld [vmem:[%s332 + $0x10] sm:$0xf]
        %v454 = vld [vmem:[%s332 + $0x14] sm:$0xf]
        %v455 = vld [vmem:[%s332 + $0x18] sm:$0xf]
        %v456 = vld [vmem:[%s332 + $0x1c] sm:$0xf]
        %v457 = vld [vmem:[%s332 + $0x20] sm:$0xf]
        %v458 = vld [vmem:[%s332 + $0x24] sm:$0xf]
        %v459 = vld [vmem:[%s332 + $0x28] sm:$0xf]
        %v460 = vld [vmem:[%s332 + $0x2c] sm:$0xf]
        %v461 = vld [vmem:[%s332 + $0x30] sm:$0xf]
        %v462 = vld [vmem:[%s332 + $0x34] sm:$0xf]
        %v463 = vld [vmem:[%s332 + $0x38] sm:$0xf]
        %v464 = vld [vmem:[%s332 + $0x3c] sm:$0xf]
        %v465 = vld [vmem:[%s342] sm:$0xf]
        %v466 = vld [vmem:[%s342 + $0x4] sm:$0xf]
        %v467 = vld [vmem:[%s342 + $0x8] sm:$0xf]
        %v468 = vld [vmem:[%s342 + $0xc] sm:$0xf]
        %v469 = vld [vmem:[%s342 + $0x10] sm:$0xf]
        %v470 = vld [vmem:[%s342 + $0x14] sm:$0xf]
        %v471 = vld [vmem:[%s342 + $0x18] sm:$0xf]
        %v472 = vld [vmem:[%s342 + $0x1c] sm:$0xf]
        %v473 = vld [vmem:[%s342 + $0x20] sm:$0xf]
        %v474 = vld [vmem:[%s342 + $0x24] sm:$0xf]
        %v475 = vld [vmem:[%s342 + $0x28] sm:$0xf]
        %v476 = vld [vmem:[%s342 + $0x2c] sm:$0xf]
        %v477 = vld [vmem:[%s342 + $0x30] sm:$0xf]
        %v478 = vld [vmem:[%s342 + $0x34] sm:$0xf]
        %v479 = vld [vmem:[%s342 + $0x38] sm:$0xf]
        %v480 = vld [vmem:[%s342 + $0x3c] sm:$0xf]
        %v481 = vld [vmem:[%s352] sm:$0xf]
        %v482 = vld [vmem:[%s352 + $0x4] sm:$0xf]
        %v483 = vld [vmem:[%s352 + $0x8] sm:$0xf]
        %v484 = vld [vmem:[%s352 + $0xc] sm:$0xf]
        %v485 = vld [vmem:[%s352 + $0x10] sm:$0xf]
        %v486 = vld [vmem:[%s352 + $0x14] sm:$0xf]
        %v487 = vld [vmem:[%s352 + $0x18] sm:$0xf]
        %v488 = vld [vmem:[%s352 + $0x1c] sm:$0xf]
        %v489 = vld [vmem:[%s352 + $0x20] sm:$0xf]
        %v490 = vld [vmem:[%s352 + $0x24] sm:$0xf]
        %v491 = vld [vmem:[%s352 + $0x28] sm:$0xf]
        %v492 = vld [vmem:[%s352 + $0x2c] sm:$0xf]
        %v493 = vld [vmem:[%s352 + $0x30] sm:$0xf]
        %v494 = vld [vmem:[%s352 + $0x34] sm:$0xf]
        %v495 = vld [vmem:[%s352 + $0x38] sm:$0xf]
        %v496 = vld [vmem:[%s352 + $0x3c] sm:$0xf]
        %v513 = vunpack.c.l.b16 %v449
        %v514 = vunpack.c.l.b16 %v450
        %v515 = vunpack.c.l.b16 %v451
        %v516 = vunpack.c.l.b16 %v452
        %v517 = vunpack.c.l.b16 %v453
        %v518 = vunpack.c.l.b16 %v454
        %v519 = vunpack.c.l.b16 %v455
        %v520 = vunpack.c.l.b16 %v456
        %v521 = vunpack.c.l.b16 %v457
        %v522 = vunpack.c.l.b16 %v458
        %v523 = vunpack.c.l.b16 %v459
        %v524 = vunpack.c.l.b16 %v460
        %v525 = vunpack.c.l.b16 %v461
        %v526 = vunpack.c.l.b16 %v462
        %v527 = vunpack.c.l.b16 %v463
        %v528 = vunpack.c.l.b16 %v464
        %v529 = vpack.c.b16 %v514, %v513
        %v530 = vpack.c.b16 %v516, %v515
        %v531 = vpack.c.b16 %v518, %v517
        %v532 = vpack.c.b16 %v520, %v519
        %v533 = vpack.c.b16 %v522, %v521
        %v534 = vpack.c.b16 %v524, %v523
        %v535 = vpack.c.b16 %v526, %v525
        %v536 = vpack.c.b16 %v528, %v527
        %v561 = vunpack.c.l.b16 %v465
        %v562 = vunpack.c.l.b16 %v466
        %v563 = vunpack.c.l.b16 %v467
        %v564 = vunpack.c.l.b16 %v468
        %v565 = vunpack.c.l.b16 %v469
        %v566 = vunpack.c.l.b16 %v470
        %v567 = vunpack.c.l.b16 %v471
        %v568 = vunpack.c.l.b16 %v472
        %v569 = vunpack.c.l.b16 %v473
        %v570 = vunpack.c.l.b16 %v474
        %v571 = vunpack.c.l.b16 %v475
        %v572 = vunpack.c.l.b16 %v476
        %v573 = vunpack.c.l.b16 %v477
        %v574 = vunpack.c.l.b16 %v478
        %v575 = vunpack.c.l.b16 %v479
        %v576 = vunpack.c.l.b16 %v480
        %v577 = vpack.c.b16 %v562, %v561
        %v578 = vpack.c.b16 %v564, %v563
        %v579 = vpack.c.b16 %v566, %v565
        %v580 = vpack.c.b16 %v568, %v567
        %v581 = vpack.c.b16 %v570, %v569
        %v582 = vpack.c.b16 %v572, %v571
        %v583 = vpack.c.b16 %v574, %v573
        %v584 = vpack.c.b16 %v576, %v575
        %593 = vmatpush.bf16.xpose.msra.mxu0 %v584
        %594 = vmatpush.bf16.xpose.msra.mxu0 %v583
        %595 = vmatpush.bf16.xpose.msra.mxu0 %v582
        %596 = vmatpush.bf16.xpose.msra.mxu0 %v581
        %597 = vmatpush.bf16.xpose.msra.mxu0 %v580
        %598 = vmatpush.bf16.xpose.msra.mxu0 %v579
        %599 = vmatpush.bf16.xpose.msra.mxu0 %v578
        %600 = vmatpush.bf16.xpose.msra.mxu0 %v577
        %601 = vmatmul.bf16.gmra.mxu0 %v529
        %v602 = vpop.f32.mrf.mxu0
        %v603 = vadd.f32 0.0, %v602
        %v604 = vpop.f32.mrf.mxu0
        %v605 = vadd.f32 0.0, %v604
        %606 = vmatmul.bf16.gmra.mxu0 %v530
        %v607 = vpop.f32.mrf.mxu0
        %v608 = vadd.f32 0.0, %v607
        %v609 = vpop.f32.mrf.mxu0
        %v610 = vadd.f32 0.0, %v609
        %611 = vmatmul.bf16.gmra.mxu0 %v531
        %v612 = vpop.f32.mrf.mxu0
        %v613 = vadd.f32 0.0, %v612
        %v614 = vpop.f32.mrf.mxu0
        %v615 = vadd.f32 0.0, %v614
        %616 = vmatmul.bf16.gmra.mxu0 %v532
        %v617 = vpop.f32.mrf.mxu0
        %v618 = vadd.f32 0.0, %v617
        %v619 = vpop.f32.mrf.mxu0
        %v620 = vadd.f32 0.0, %v619
        %621 = vmatmul.bf16.gmra.mxu0 %v533
        %v622 = vpop.f32.mrf.mxu0
        %v623 = vadd.f32 0.0, %v622
        %v624 = vpop.f32.mrf.mxu0
        %v625 = vadd.f32 0.0, %v624
        %626 = vmatmul.bf16.gmra.mxu0 %v534
        %v627 = vpop.f32.mrf.mxu0
        %v628 = vadd.f32 0.0, %v627
        %v629 = vpop.f32.mrf.mxu0
        %v630 = vadd.f32 0.0, %v629
        %631 = vmatmul.bf16.gmra.mxu0 %v535
        %v632 = vpop.f32.mrf.mxu0
        %v633 = vadd.f32 0.0, %v632
        %v634 = vpop.f32.mrf.mxu0
        %v635 = vadd.f32 0.0, %v634
        %636 = vmatmul.bf16.gmra.mxu0 %v536
        %v637 = vpop.f32.mrf.mxu0
        %v638 = vadd.f32 0.0, %v637
        %v639 = vpop.f32.mrf.mxu0
        %v640 = vadd.f32 0.0, %v639
        %641 = vdwg.mxu0
        %v642 = vmul.f32 %v603, 0.125
        %v643 = vmul.f32 %v605, 0.125
        %v644 = vmul.f32 %v608, 0.125
        %v645 = vmul.f32 %v610, 0.125
        %v646 = vmul.f32 %v613, 0.125
        %v647 = vmul.f32 %v615, 0.125
        %v648 = vmul.f32 %v618, 0.125
        %v649 = vmul.f32 %v620, 0.125
        %v650 = vmul.f32 %v623, 0.125
        %v651 = vmul.f32 %v625, 0.125
        %v652 = vmul.f32 %v628, 0.125
        %v653 = vmul.f32 %v630, 0.125
        %v654 = vmul.f32 %v633, 0.125
        %v655 = vmul.f32 %v635, 0.125
        %v656 = vmul.f32 %v638, 0.125
        %v657 = vmul.f32 %v640, 0.125
        %v658 = vld [vmem:[%s322] sm:$0x1]
        %v660 = vperm.slane %v658, 0
        %v662 = vadd.f32 %v642, %v660
        %v663 = vadd.f32 %v643, %v660
        %v664 = vadd.f32 %v644, %v660
        %v665 = vadd.f32 %v645, %v660
        %v666 = vadd.f32 %v646, %v660
        %v667 = vadd.f32 %v647, %v660
        %v668 = vadd.f32 %v648, %v660
        %v669 = vadd.f32 %v649, %v660
        %v670 = vadd.f32 %v650, %v660
        %v671 = vadd.f32 %v651, %v660
        %v672 = vadd.f32 %v652, %v660
        %v673 = vadd.f32 %v653, %v660
        %v674 = vadd.f32 %v654, %v660
        %v675 = vadd.f32 %v655, %v660
        %v676 = vadd.f32 %v656, %v660
        %v677 = vadd.f32 %v657, %v660
        %v678 = vld [vmem:[#allocation2] sm:$0xff]
        %v679 = vld [vmem:[#allocation2 + $0x8] sm:$0xff]
        %v680 = vld [vmem:[#allocation2 + $0x10] sm:$0xff]
        %v681 = vld [vmem:[#allocation2 + $0x18] sm:$0xff]
        %v682 = vld [vmem:[#allocation2 + $0x20] sm:$0xff]
        %v683 = vld [vmem:[#allocation2 + $0x28] sm:$0xff]
        %v684 = vld [vmem:[#allocation2 + $0x30] sm:$0xff]
        %v685 = vld [vmem:[#allocation2 + $0x38] sm:$0xff]
        %v686 = vld [vmem:[#allocation2 + $0x40] sm:$0xff]
        %v687 = vld [vmem:[#allocation2 + $0x48] sm:$0xff]
        %v688 = vld [vmem:[#allocation2 + $0x50] sm:$0xff]
        %v689 = vld [vmem:[#allocation2 + $0x58] sm:$0xff]
        %v690 = vld [vmem:[#allocation2 + $0x60] sm:$0xff]
        %v691 = vld [vmem:[#allocation2 + $0x68] sm:$0xff]
        %v692 = vld [vmem:[#allocation2 + $0x70] sm:$0xff]
        %v693 = vld [vmem:[#allocation2 + $0x78] sm:$0xff]
        %694 = vmax.xlane.f32.xlu0 %v662
        %v695 = vpop.xlane.xlu0 %694
        %696 = vmax.xlane.f32.xlu0 %v663
        %v697 = vpop.xlane.xlu0 %696
        %698 = vmax.xlane.f32.xlu0 %v664
        %v699 = vpop.xlane.xlu0 %698
        %700 = vmax.xlane.f32.xlu0 %v665
        %v701 = vpop.xlane.xlu0 %700
        %702 = vmax.xlane.f32.xlu0 %v666
        %v703 = vpop.xlane.xlu0 %702
        %704 = vmax.xlane.f32.xlu0 %v667
        %v705 = vpop.xlane.xlu0 %704
        %706 = vmax.xlane.f32.xlu0 %v668
        %v707 = vpop.xlane.xlu0 %706
        %708 = vmax.xlane.f32.xlu0 %v669
        %v709 = vpop.xlane.xlu0 %708
        %710 = vmax.xlane.f32.xlu0 %v670
        %v711 = vpop.xlane.xlu0 %710
        %712 = vmax.xlane.f32.xlu0 %v671
        %v713 = vpop.xlane.xlu0 %712
        %714 = vmax.xlane.f32.xlu0 %v672
        %v715 = vpop.xlane.xlu0 %714
        %716 = vmax.xlane.f32.xlu0 %v673
        %v717 = vpop.xlane.xlu0 %716
        %718 = vmax.xlane.f32.xlu0 %v674
        %v719 = vpop.xlane.xlu0 %718
        %720 = vmax.xlane.f32.xlu0 %v675
        %v721 = vpop.xlane.xlu0 %720
        %722 = vmax.xlane.f32.xlu0 %v676
        %v723 = vpop.xlane.xlu0 %722
        %724 = vmax.xlane.f32.xlu0 %v677
        %v725 = vpop.xlane.xlu0 %724
        %v726 = vmax.f32 %v678, %v695
        %v727 = vmax.f32 %v679, %v697
        %v728 = vmax.f32 %v680, %v699
        %v729 = vmax.f32 %v681, %v701
        %v730 = vmax.f32 %v682, %v703
        %v731 = vmax.f32 %v683, %v705
        %v732 = vmax.f32 %v684, %v707
        %v733 = vmax.f32 %v685, %v709
        %v734 = vmax.f32 %v686, %v711
        %v735 = vmax.f32 %v687, %v713
        %v736 = vmax.f32 %v688, %v715
        %v737 = vmax.f32 %v689, %v717
        %v738 = vmax.f32 %v690, %v719
        %v739 = vmax.f32 %v691, %v721
        %v740 = vmax.f32 %v692, %v723
        %v741 = vmax.f32 %v693, %v725
        %v742 = vsub.f32 %v678, %v726
        %v743 = vsub.f32 %v679, %v727
        %v744 = vsub.f32 %v680, %v728
        %v745 = vsub.f32 %v681, %v729
        %v746 = vsub.f32 %v682, %v730
        %v747 = vsub.f32 %v683, %v731
        %v748 = vsub.f32 %v684, %v732
        %v749 = vsub.f32 %v685, %v733
        %v750 = vsub.f32 %v686, %v734
        %v751 = vsub.f32 %v687, %v735
        %v752 = vsub.f32 %v688, %v736
        %v753 = vsub.f32 %v689, %v737
        %v754 = vsub.f32 %v690, %v738
        %v755 = vsub.f32 %v691, %v739
        %v756 = vsub.f32 %v692, %v740
        %v757 = vsub.f32 %v693, %v741
        %v758 = vmul.f32 %v742, 1.442695
        %v759 = vpow.pop %v758
        %v760 = vmul.f32 %v743, 1.442695
        %v761 = vpow.pop %v760
        %v762 = vmul.f32 %v744, 1.442695
        %v763 = vpow.pop %v762
        %v764 = vmul.f32 %v745, 1.442695
        %v765 = vpow.pop %v764
        %v766 = vmul.f32 %v746, 1.442695
        %v767 = vpow.pop %v766
        %v768 = vmul.f32 %v747, 1.442695
        %v769 = vpow.pop %v768
        %v770 = vmul.f32 %v748, 1.442695
        %v771 = vpow.pop %v770
        %v772 = vmul.f32 %v749, 1.442695
        %v773 = vpow.pop %v772
        %v774 = vmul.f32 %v750, 1.442695
        %v775 = vpow.pop %v774
        %v776 = vmul.f32 %v751, 1.442695
        %v777 = vpow.pop %v776
        %v778 = vmul.f32 %v752, 1.442695
        %v779 = vpow.pop %v778
        %v780 = vmul.f32 %v753, 1.442695
        %v781 = vpow.pop %v780
        %v782 = vmul.f32 %v754, 1.442695
        %v783 = vpow.pop %v782
        %v784 = vmul.f32 %v755, 1.442695
        %v785 = vpow.pop %v784
        %v786 = vmul.f32 %v756, 1.442695
        %v787 = vpow.pop %v786
        %v788 = vmul.f32 %v757, 1.442695
        %v789 = vpow.pop %v788
        %791 = vset.pattern.permute.xlu0 0
        %792 = vperm.xlu0 %791, %v726
        %v793 = vpop.permute.xlu0 %792
        %796 = vset.pattern.permute.xlu0 0
        %797 = vperm.xlu0 %796, %v727
        %v798 = vpop.permute.xlu0 %797
        %801 = vset.pattern.permute.xlu0 0
        %802 = vperm.xlu0 %801, %v728
        %v803 = vpop.permute.xlu0 %802
        %806 = vset.pattern.permute.xlu0 0
        %807 = vperm.xlu0 %806, %v729
        %v808 = vpop.permute.xlu0 %807
        %811 = vset.pattern.permute.xlu0 0
        %812 = vperm.xlu0 %811, %v730
        %v813 = vpop.permute.xlu0 %812
        %816 = vset.pattern.permute.xlu0 0
        %817 = vperm.xlu0 %816, %v731
        %v818 = vpop.permute.xlu0 %817
        %821 = vset.pattern.permute.xlu0 0
        %822 = vperm.xlu0 %821, %v732
        %v823 = vpop.permute.xlu0 %822
        %826 = vset.pattern.permute.xlu0 0
        %827 = vperm.xlu0 %826, %v733
        %v828 = vpop.permute.xlu0 %827
        %831 = vset.pattern.permute.xlu0 0
        %832 = vperm.xlu0 %831, %v734
        %v833 = vpop.permute.xlu0 %832
        %836 = vset.pattern.permute.xlu0 0
        %837 = vperm.xlu0 %836, %v735
        %v838 = vpop.permute.xlu0 %837
        %841 = vset.pattern.permute.xlu0 0
        %842 = vperm.xlu0 %841, %v736
        %v843 = vpop.permute.xlu0 %842
        %846 = vset.pattern.permute.xlu0 0
        %847 = vperm.xlu0 %846, %v737
        %v848 = vpop.permute.xlu0 %847
        %851 = vset.pattern.permute.xlu0 0
        %852 = vperm.xlu0 %851, %v738
        %v853 = vpop.permute.xlu0 %852
        %856 = vset.pattern.permute.xlu0 0
        %857 = vperm.xlu0 %856, %v739
        %v858 = vpop.permute.xlu0 %857
        %861 = vset.pattern.permute.xlu0 0
        %862 = vperm.xlu0 %861, %v740
        %v863 = vpop.permute.xlu0 %862
        %866 = vset.pattern.permute.xlu0 0
        %867 = vperm.xlu0 %866, %v741
        %v868 = vpop.permute.xlu0 %867
        %v870 = vsub.f32 %v662, %v793
        %v871 = vsub.f32 %v663, %v798
        %v872 = vsub.f32 %v664, %v803
        %v873 = vsub.f32 %v665, %v808
        %v874 = vsub.f32 %v666, %v813
        %v875 = vsub.f32 %v667, %v818
        %v876 = vsub.f32 %v668, %v823
        %v877 = vsub.f32 %v669, %v828
        %v878 = vsub.f32 %v670, %v833
        %v879 = vsub.f32 %v671, %v838
        %v880 = vsub.f32 %v672, %v843
        %v881 = vsub.f32 %v673, %v848
        %v882 = vsub.f32 %v674, %v853
        %v883 = vsub.f32 %v675, %v858
        %v884 = vsub.f32 %v676, %v863
        %v885 = vsub.f32 %v677, %v868
        %v886 = vmul.f32 %v870, 1.442695
        %v887 = vpow.pop %v886
        %v888 = vmul.f32 %v871, 1.442695
        %v889 = vpow.pop %v888
        %v890 = vmul.f32 %v872, 1.442695
        %v891 = vpow.pop %v890
        %v892 = vmul.f32 %v873, 1.442695
        %v893 = vpow.pop %v892
        %v894 = vmul.f32 %v874, 1.442695
        %v895 = vpow.pop %v894
        %v896 = vmul.f32 %v875, 1.442695
        %v897 = vpow.pop %v896
        %v898 = vmul.f32 %v876, 1.442695
        %v899 = vpow.pop %v898
        %v900 = vmul.f32 %v877, 1.442695
        %v901 = vpow.pop %v900
        %v902 = vmul.f32 %v878, 1.442695
        %v903 = vpow.pop %v902
        %v904 = vmul.f32 %v879, 1.442695
        %v905 = vpow.pop %v904
        %v906 = vmul.f32 %v880, 1.442695
        %v907 = vpow.pop %v906
        %v908 = vmul.f32 %v881, 1.442695
        %v909 = vpow.pop %v908
        %v910 = vmul.f32 %v882, 1.442695
        %v911 = vpow.pop %v910
        %v912 = vmul.f32 %v883, 1.442695
        %v913 = vpow.pop %v912
        %v914 = vmul.f32 %v884, 1.442695
        %v915 = vpow.pop %v914
        %v916 = vmul.f32 %v885, 1.442695
        %v917 = vpow.pop %v916
        %v918 = vld [vmem:[#allocation3] sm:$0xff]
        %v919 = vld [vmem:[#allocation3 + $0x8] sm:$0xff]
        %v920 = vld [vmem:[#allocation3 + $0x10] sm:$0xff]
        %v921 = vld [vmem:[#allocation3 + $0x18] sm:$0xff]
        %v922 = vld [vmem:[#allocation3 + $0x20] sm:$0xff]
        %v923 = vld [vmem:[#allocation3 + $0x28] sm:$0xff]
        %v924 = vld [vmem:[#allocation3 + $0x30] sm:$0xff]
        %v925 = vld [vmem:[#allocation3 + $0x38] sm:$0xff]
        %v926 = vld [vmem:[#allocation3 + $0x40] sm:$0xff]
        %v927 = vld [vmem:[#allocation3 + $0x48] sm:$0xff]
        %v928 = vld [vmem:[#allocation3 + $0x50] sm:$0xff]
        %v929 = vld [vmem:[#allocation3 + $0x58] sm:$0xff]
        %v930 = vld [vmem:[#allocation3 + $0x60] sm:$0xff]
        %v931 = vld [vmem:[#allocation3 + $0x68] sm:$0xff]
        %v932 = vld [vmem:[#allocation3 + $0x70] sm:$0xff]
        %v933 = vld [vmem:[#allocation3 + $0x78] sm:$0xff]
        %v934 = vmul.f32 %v759, %v918
        %v935 = vmul.f32 %v761, %v919
        %v936 = vmul.f32 %v763, %v920
        %v937 = vmul.f32 %v765, %v921
        %v938 = vmul.f32 %v767, %v922
        %v939 = vmul.f32 %v769, %v923
        %v940 = vmul.f32 %v771, %v924
        %v941 = vmul.f32 %v773, %v925
        %v942 = vmul.f32 %v775, %v926
        %v943 = vmul.f32 %v777, %v927
        %v944 = vmul.f32 %v779, %v928
        %v945 = vmul.f32 %v781, %v929
        %v946 = vmul.f32 %v783, %v930
        %v947 = vmul.f32 %v785, %v931
        %v948 = vmul.f32 %v787, %v932
        %v949 = vmul.f32 %v789, %v933
        %950 = vadd.xlane.f32.xlu0 %v887
        %v951 = vpop.xlane.xlu0 %950
        %952 = vadd.xlane.f32.xlu0 %v889
        %v953 = vpop.xlane.xlu0 %952
        %954 = vadd.xlane.f32.xlu0 %v891
        %v955 = vpop.xlane.xlu0 %954
        %956 = vadd.xlane.f32.xlu0 %v893
        %v957 = vpop.xlane.xlu0 %956
        %958 = vadd.xlane.f32.xlu0 %v895
        %v959 = vpop.xlane.xlu0 %958
        %960 = vadd.xlane.f32.xlu0 %v897
        %v961 = vpop.xlane.xlu0 %960
        %962 = vadd.xlane.f32.xlu0 %v899
        %v963 = vpop.xlane.xlu0 %962
        %964 = vadd.xlane.f32.xlu0 %v901
        %v965 = vpop.xlane.xlu0 %964
        %966 = vadd.xlane.f32.xlu0 %v903
        %v967 = vpop.xlane.xlu0 %966
        %968 = vadd.xlane.f32.xlu0 %v905
        %v969 = vpop.xlane.xlu0 %968
        %970 = vadd.xlane.f32.xlu0 %v907
        %v971 = vpop.xlane.xlu0 %970
        %972 = vadd.xlane.f32.xlu0 %v909
        %v973 = vpop.xlane.xlu0 %972
        %974 = vadd.xlane.f32.xlu0 %v911
        %v975 = vpop.xlane.xlu0 %974
        %976 = vadd.xlane.f32.xlu0 %v913
        %v977 = vpop.xlane.xlu0 %976
        %978 = vadd.xlane.f32.xlu0 %v915
        %v979 = vpop.xlane.xlu0 %978
        %980 = vadd.xlane.f32.xlu0 %v917
        %v981 = vpop.xlane.xlu0 %980
        %v982 = vadd.f32 %v934, %v951
        %v983 = vadd.f32 %v935, %v953
        %v984 = vadd.f32 %v936, %v955
        %v985 = vadd.f32 %v937, %v957
        %v986 = vadd.f32 %v938, %v959
        %v987 = vadd.f32 %v939, %v961
        %v988 = vadd.f32 %v940, %v963
        %v989 = vadd.f32 %v941, %v965
        %v990 = vadd.f32 %v942, %v967
        %v991 = vadd.f32 %v943, %v969
        %v992 = vadd.f32 %v944, %v971
        %v993 = vadd.f32 %v945, %v973
        %v994 = vadd.f32 %v946, %v975
        %v995 = vadd.f32 %v947, %v977
        %v996 = vadd.f32 %v948, %v979
        %v997 = vadd.f32 %v949, %v981
        %vm998 = vcmask 7168
        %999 = vst.msk [vmem:[#allocation3] sm:$0xff] %vm998, %v982
        %1000 = vst.msk [vmem:[#allocation3 + $0x8] sm:$0xff] %vm998, %v983
        %1001 = vst.msk [vmem:[#allocation3 + $0x10] sm:$0xff] %vm998, %v984
        %1002 = vst.msk [vmem:[#allocation3 + $0x18] sm:$0xff] %vm998, %v985
        %1003 = vst.msk [vmem:[#allocation3 + $0x20] sm:$0xff] %vm998, %v986
        %1004 = vst.msk [vmem:[#allocation3 + $0x28] sm:$0xff] %vm998, %v987
        %1005 = vst.msk [vmem:[#allocation3 + $0x30] sm:$0xff] %vm998, %v988
        %1006 = vst.msk [vmem:[#allocation3 + $0x38] sm:$0xff] %vm998, %v989
        %1007 = vst.msk [vmem:[#allocation3 + $0x40] sm:$0xff] %vm998, %v990
        %1008 = vst.msk [vmem:[#allocation3 + $0x48] sm:$0xff] %vm998, %v991
        %1009 = vst.msk [vmem:[#allocation3 + $0x50] sm:$0xff] %vm998, %v992
        %1010 = vst.msk [vmem:[#allocation3 + $0x58] sm:$0xff] %vm998, %v993
        %1011 = vst.msk [vmem:[#allocation3 + $0x60] sm:$0xff] %vm998, %v994
        %1012 = vst.msk [vmem:[#allocation3 + $0x68] sm:$0xff] %vm998, %v995
        %1013 = vst.msk [vmem:[#allocation3 + $0x70] sm:$0xff] %vm998, %v996
        %1014 = vst.msk [vmem:[#allocation3 + $0x78] sm:$0xff] %vm998, %v997
        %v1015 = vld [vmem:[#allocation4] sm:$0xff]
        %v1016 = vld [vmem:[#allocation4 + $0x8] sm:$0xff]
        %v1017 = vld [vmem:[#allocation4 + $0x10] sm:$0xff]
        %v1018 = vld [vmem:[#allocation4 + $0x18] sm:$0xff]
        %v1019 = vld [vmem:[#allocation4 + $0x20] sm:$0xff]
        %v1020 = vld [vmem:[#allocation4 + $0x28] sm:$0xff]
        %v1021 = vld [vmem:[#allocation4 + $0x30] sm:$0xff]
        %v1022 = vld [vmem:[#allocation4 + $0x38] sm:$0xff]
        %v1023 = vld [vmem:[#allocation4 + $0x40] sm:$0xff]
        %v1024 = vld [vmem:[#allocation4 + $0x48] sm:$0xff]
        %v1025 = vld [vmem:[#allocation4 + $0x50] sm:$0xff]
        %v1026 = vld [vmem:[#allocation4 + $0x58] sm:$0xff]
        %v1027 = vld [vmem:[#allocation4 + $0x60] sm:$0xff]
        %v1028 = vld [vmem:[#allocation4 + $0x68] sm:$0xff]
        %v1029 = vld [vmem:[#allocation4 + $0x70] sm:$0xff]
        %v1030 = vld [vmem:[#allocation4 + $0x78] sm:$0xff]
        %1032 = vset.pattern.permute.xlu0 0
        %1033 = vperm.xlu0 %1032, %v759
        %v1034 = vpop.permute.xlu0 %1033
        %1037 = vset.pattern.permute.xlu0 0
        %1038 = vperm.xlu0 %1037, %v761
        %v1039 = vpop.permute.xlu0 %1038
        %1042 = vset.pattern.permute.xlu0 0
        %1043 = vperm.xlu0 %1042, %v763
        %v1044 = vpop.permute.xlu0 %1043
        %1047 = vset.pattern.permute.xlu0 0
        %1048 = vperm.xlu0 %1047, %v765
        %v1049 = vpop.permute.xlu0 %1048
        %1052 = vset.pattern.permute.xlu0 0
        %1053 = vperm.xlu0 %1052, %v767
        %v1054 = vpop.permute.xlu0 %1053
        %1057 = vset.pattern.permute.xlu0 0
        %1058 = vperm.xlu0 %1057, %v769
        %v1059 = vpop.permute.xlu0 %1058
        %1062 = vset.pattern.permute.xlu0 0
        %1063 = vperm.xlu0 %1062, %v771
        %v1064 = vpop.permute.xlu0 %1063
        %1067 = vset.pattern.permute.xlu0 0
        %1068 = vperm.xlu0 %1067, %v773
        %v1069 = vpop.permute.xlu0 %1068
        %1072 = vset.pattern.permute.xlu0 0
        %1073 = vperm.xlu0 %1072, %v775
        %v1074 = vpop.permute.xlu0 %1073
        %1077 = vset.pattern.permute.xlu0 0
        %1078 = vperm.xlu0 %1077, %v777
        %v1079 = vpop.permute.xlu0 %1078
        %1082 = vset.pattern.permute.xlu0 0
        %1083 = vperm.xlu0 %1082, %v779
        %v1084 = vpop.permute.xlu0 %1083
        %1087 = vset.pattern.permute.xlu0 0
        %1088 = vperm.xlu0 %1087, %v781
        %v1089 = vpop.permute.xlu0 %1088
        %1092 = vset.pattern.permute.xlu0 0
        %1093 = vperm.xlu0 %1092, %v783
        %v1094 = vpop.permute.xlu0 %1093
        %1097 = vset.pattern.permute.xlu0 0
        %1098 = vperm.xlu0 %1097, %v785
        %v1099 = vpop.permute.xlu0 %1098
        %1102 = vset.pattern.permute.xlu0 0
        %1103 = vperm.xlu0 %1102, %v787
        %v1104 = vpop.permute.xlu0 %1103
        %1107 = vset.pattern.permute.xlu0 0
        %1108 = vperm.xlu0 %1107, %v789
        %v1109 = vpop.permute.xlu0 %1108
        %v1111 = vmul.f32 %v1034, %v1015
        %v1112 = vmul.f32 %v1039, %v1016
        %v1113 = vmul.f32 %v1044, %v1017
        %v1114 = vmul.f32 %v1049, %v1018
        %v1115 = vmul.f32 %v1054, %v1019
        %v1116 = vmul.f32 %v1059, %v1020
        %v1117 = vmul.f32 %v1064, %v1021
        %v1118 = vmul.f32 %v1069, %v1022
        %v1119 = vmul.f32 %v1074, %v1023
        %v1120 = vmul.f32 %v1079, %v1024
        %v1121 = vmul.f32 %v1084, %v1025
        %v1122 = vmul.f32 %v1089, %v1026
        %v1123 = vmul.f32 %v1094, %v1027
        %v1124 = vmul.f32 %v1099, %v1028
        %v1125 = vmul.f32 %v1104, %v1029
        %v1126 = vmul.f32 %v1109, %v1030
        %v1127 = vpack.c.bf16 %v889, %v887
        %v1128 = vpack.c.bf16 %v893, %v891
        %v1129 = vpack.c.bf16 %v897, %v895
        %v1130 = vpack.c.bf16 %v901, %v899
        %v1131 = vpack.c.bf16 %v905, %v903
        %v1132 = vpack.c.bf16 %v909, %v907
        %v1133 = vpack.c.bf16 %v913, %v911
        %v1134 = vpack.c.bf16 %v917, %v915
        %v1151 = vunpack.c.l.b16 %v481
        %v1152 = vunpack.c.l.b16 %v482
        %v1153 = vunpack.c.l.b16 %v483
        %v1154 = vunpack.c.l.b16 %v484
        %v1155 = vunpack.c.l.b16 %v485
        %v1156 = vunpack.c.l.b16 %v486
        %v1157 = vunpack.c.l.b16 %v487
        %v1158 = vunpack.c.l.b16 %v488
        %v1159 = vunpack.c.l.b16 %v489
        %v1160 = vunpack.c.l.b16 %v490
        %v1161 = vunpack.c.l.b16 %v491
        %v1162 = vunpack.c.l.b16 %v492
        %v1163 = vunpack.c.l.b16 %v493
        %v1164 = vunpack.c.l.b16 %v494
        %v1165 = vunpack.c.l.b16 %v495
        %v1166 = vunpack.c.l.b16 %v496
        %v1167 = vpack.c.b16 %v1152, %v1151
        %v1168 = vpack.c.b16 %v1154, %v1153
        %v1169 = vpack.c.b16 %v1156, %v1155
        %v1170 = vpack.c.b16 %v1158, %v1157
        %v1171 = vpack.c.b16 %v1160, %v1159
        %v1172 = vpack.c.b16 %v1162, %v1161
        %v1173 = vpack.c.b16 %v1164, %v1163
        %v1174 = vpack.c.b16 %v1166, %v1165
        %1183 = vmatpush.bf16.msra.mxu0 %v1174
        %1184 = vmatpush.bf16.msra.mxu0 %v1173
        %1185 = vmatpush.bf16.msra.mxu0 %v1172
        %1186 = vmatpush.bf16.msra.mxu0 %v1171
        %1187 = vmatpush.bf16.msra.mxu0 %v1170
        %1188 = vmatpush.bf16.msra.mxu0 %v1169
        %1189 = vmatpush.bf16.msra.mxu0 %v1168
        %1190 = vmatpush.bf16.msra.mxu0 %v1167
        %1191 = vmatmul.bf16.gmra.mxu0 %v1127
        %v1192 = vpop.f32.mrf.mxu0
        %v1193 = vadd.f32 0.0, %v1192
        %v1194 = vpop.f32.mrf.mxu0
        %v1195 = vadd.f32 0.0, %v1194
        %1196 = vmatmul.bf16.gmra.mxu0 %v1128
        %v1197 = vpop.f32.mrf.mxu0
        %v1198 = vadd.f32 0.0, %v1197
        %v1199 = vpop.f32.mrf.mxu0
        %v1200 = vadd.f32 0.0, %v1199
        %1201 = vmatmul.bf16.gmra.mxu0 %v1129
        %v1202 = vpop.f32.mrf.mxu0
        %v1203 = vadd.f32 0.0, %v1202
        %v1204 = vpop.f32.mrf.mxu0
        %v1205 = vadd.f32 0.0, %v1204
        %1206 = vmatmul.bf16.gmra.mxu0 %v1130
        %v1207 = vpop.f32.mrf.mxu0
        %v1208 = vadd.f32 0.0, %v1207
        %v1209 = vpop.f32.mrf.mxu0
        %v1210 = vadd.f32 0.0, %v1209
        %1211 = vmatmul.bf16.gmra.mxu0 %v1131
        %v1212 = vpop.f32.mrf.mxu0
        %v1213 = vadd.f32 0.0, %v1212
        %v1214 = vpop.f32.mrf.mxu0
        %v1215 = vadd.f32 0.0, %v1214
        %1216 = vmatmul.bf16.gmra.mxu0 %v1132
        %v1217 = vpop.f32.mrf.mxu0
        %v1218 = vadd.f32 0.0, %v1217
        %v1219 = vpop.f32.mrf.mxu0
        %v1220 = vadd.f32 0.0, %v1219
        %1221 = vmatmul.bf16.gmra.mxu0 %v1133
        %v1222 = vpop.f32.mrf.mxu0
        %v1223 = vadd.f32 0.0, %v1222
        %v1224 = vpop.f32.mrf.mxu0
        %v1225 = vadd.f32 0.0, %v1224
        %1226 = vmatmul.bf16.gmra.mxu0 %v1134
        %v1227 = vpop.f32.mrf.mxu0
        %v1228 = vadd.f32 0.0, %v1227
        %v1229 = vpop.f32.mrf.mxu0
        %v1230 = vadd.f32 0.0, %v1229
        %1231 = vdwg.mxu0
        %v1232 = vadd.f32 %v1111, %v1193
        %v1233 = vadd.f32 %v1112, %v1195
        %v1234 = vadd.f32 %v1113, %v1198
        %v1235 = vadd.f32 %v1114, %v1200
        %v1236 = vadd.f32 %v1115, %v1203
        %v1237 = vadd.f32 %v1116, %v1205
        %v1238 = vadd.f32 %v1117, %v1208
        %v1239 = vadd.f32 %v1118, %v1210
        %v1240 = vadd.f32 %v1119, %v1213
        %v1241 = vadd.f32 %v1120, %v1215
        %v1242 = vadd.f32 %v1121, %v1218
        %v1243 = vadd.f32 %v1122, %v1220
        %v1244 = vadd.f32 %v1123, %v1223
        %v1245 = vadd.f32 %v1124, %v1225
        %v1246 = vadd.f32 %v1125, %v1228
        %v1247 = vadd.f32 %v1126, %v1230
        %1248 = vst [vmem:[#allocation4] sm:$0xff] %v1232
        %1249 = vst [vmem:[#allocation4 + $0x8] sm:$0xff] %v1233
        %1250 = vst [vmem:[#allocation4 + $0x10] sm:$0xff] %v1234
        %1251 = vst [vmem:[#allocation4 + $0x18] sm:$0xff] %v1235
        %1252 = vst [vmem:[#allocation4 + $0x20] sm:$0xff] %v1236
        %1253 = vst [vmem:[#allocation4 + $0x28] sm:$0xff] %v1237
        %1254 = vst [vmem:[#allocation4 + $0x30] sm:$0xff] %v1238
        %1255 = vst [vmem:[#allocation4 + $0x38] sm:$0xff] %v1239
        %1256 = vst [vmem:[#allocation4 + $0x40] sm:$0xff] %v1240
        %1257 = vst [vmem:[#allocation4 + $0x48] sm:$0xff] %v1241
        %1258 = vst [vmem:[#allocation4 + $0x50] sm:$0xff] %v1242
        %1259 = vst [vmem:[#allocation4 + $0x58] sm:$0xff] %v1243
        %1260 = vst [vmem:[#allocation4 + $0x60] sm:$0xff] %v1244
        %1261 = vst [vmem:[#allocation4 + $0x68] sm:$0xff] %v1245
        %1262 = vst [vmem:[#allocation4 + $0x70] sm:$0xff] %v1246
        %1263 = vst [vmem:[#allocation4 + $0x78] sm:$0xff] %v1247
        %1264 = vst.msk [vmem:[#allocation2] sm:$0xff] %vm998, %v726
        %1265 = vst.msk [vmem:[#allocation2 + $0x8] sm:$0xff] %vm998, %v727
        %1266 = vst.msk [vmem:[#allocation2 + $0x10] sm:$0xff] %vm998, %v728
        %1267 = vst.msk [vmem:[#allocation2 + $0x18] sm:$0xff] %vm998, %v729
        %1268 = vst.msk [vmem:[#allocation2 + $0x20] sm:$0xff] %vm998, %v730
        %1269 = vst.msk [vmem:[#allocation2 + $0x28] sm:$0xff] %vm998, %v731
        %1270 = vst.msk [vmem:[#allocation2 + $0x30] sm:$0xff] %vm998, %v732
        %1271 = vst.msk [vmem:[#allocation2 + $0x38] sm:$0xff] %vm998, %v733
        %1272 = vst.msk [vmem:[#allocation2 + $0x40] sm:$0xff] %vm998, %v734
        %1273 = vst.msk [vmem:[#allocation2 + $0x48] sm:$0xff] %vm998, %v735
        %1274 = vst.msk [vmem:[#allocation2 + $0x50] sm:$0xff] %vm998, %v736
        %1275 = vst.msk [vmem:[#allocation2 + $0x58] sm:$0xff] %vm998, %v737
        %1276 = vst.msk [vmem:[#allocation2 + $0x60] sm:$0xff] %vm998, %v738
        %1277 = vst.msk [vmem:[#allocation2 + $0x68] sm:$0xff] %vm998, %v739
        %1278 = vst.msk [vmem:[#allocation2 + $0x70] sm:$0xff] %vm998, %v740
        %1279 = vst.msk [vmem:[#allocation2 + $0x78] sm:$0xff] %vm998, %v741
        %p1280 = scmp.eq.s32.totalorder %s36, 1
        // Predicated region
        $region57: #{tpu_custom_call.1} parent=35 // pred_check
          %p1281 = pneg %p1280
        $region58: #{tpu_custom_call.1} parent=35 // pred_check_branch
          %1283 = sbr.rel (%p1281) target = $region60
        $region59: #{tpu_custom_call.1} parent=35 // pred_region
          %v1284 = vld [vmem:[#allocation3] sm:$0xff]
          %v1285 = vld [vmem:[#allocation3 + $0x8] sm:$0xff]
          %v1286 = vld [vmem:[#allocation3 + $0x10] sm:$0xff]
          %v1287 = vld [vmem:[#allocation3 + $0x18] sm:$0xff]
          %v1288 = vld [vmem:[#allocation3 + $0x20] sm:$0xff]
          %v1289 = vld [vmem:[#allocation3 + $0x28] sm:$0xff]
          %v1290 = vld [vmem:[#allocation3 + $0x30] sm:$0xff]
          %v1291 = vld [vmem:[#allocation3 + $0x38] sm:$0xff]
          %v1292 = vld [vmem:[#allocation3 + $0x40] sm:$0xff]
          %v1293 = vld [vmem:[#allocation3 + $0x48] sm:$0xff]
          %v1294 = vld [vmem:[#allocation3 + $0x50] sm:$0xff]
          %v1295 = vld [vmem:[#allocation3 + $0x58] sm:$0xff]
          %v1296 = vld [vmem:[#allocation3 + $0x60] sm:$0xff]
          %v1297 = vld [vmem:[#allocation3 + $0x68] sm:$0xff]
          %v1298 = vld [vmem:[#allocation3 + $0x70] sm:$0xff]
          %v1299 = vld [vmem:[#allocation3 + $0x78] sm:$0xff]
          %v1300 = vrcp.pop %v1284
          %v1301 = vrcp.pop %v1285
          %v1302 = vrcp.pop %v1286
          %v1303 = vrcp.pop %v1287
          %v1304 = vrcp.pop %v1288
          %v1305 = vrcp.pop %v1289
          %v1306 = vrcp.pop %v1290
          %v1307 = vrcp.pop %v1291
          %v1308 = vrcp.pop %v1292
          %v1309 = vrcp.pop %v1293
          %v1310 = vrcp.pop %v1294
          %v1311 = vrcp.pop %v1295
          %v1312 = vrcp.pop %v1296
          %v1313 = vrcp.pop %v1297
          %v1314 = vrcp.pop %v1298
          %v1315 = vrcp.pop %v1299
          %v1316 = vld [vmem:[#allocation4] sm:$0xff]
          %v1317 = vld [vmem:[#allocation4 + $0x8] sm:$0xff]
          %v1318 = vld [vmem:[#allocation4 + $0x10] sm:$0xff]
          %v1319 = vld [vmem:[#allocation4 + $0x18] sm:$0xff]
          %v1320 = vld [vmem:[#allocation4 + $0x20] sm:$0xff]
          %v1321 = vld [vmem:[#allocation4 + $0x28] sm:$0xff]
          %v1322 = vld [vmem:[#allocation4 + $0x30] sm:$0xff]
          %v1323 = vld [vmem:[#allocation4 + $0x38] sm:$0xff]
          %v1324 = vld [vmem:[#allocation4 + $0x40] sm:$0xff]
          %v1325 = vld [vmem:[#allocation4 + $0x48] sm:$0xff]
          %v1326 = vld [vmem:[#allocation4 + $0x50] sm:$0xff]
          %v1327 = vld [vmem:[#allocation4 + $0x58] sm:$0xff]
          %v1328 = vld [vmem:[#allocation4 + $0x60] sm:$0xff]
          %v1329 = vld [vmem:[#allocation4 + $0x68] sm:$0xff]
          %v1330 = vld [vmem:[#allocation4 + $0x70] sm:$0xff]
          %v1331 = vld [vmem:[#allocation4 + $0x78] sm:$0xff]
          %1333 = vset.pattern.permute.xlu0 0
          %1334 = vperm.xlu0 %1333, %v1300
          %v1335 = vpop.permute.xlu0 %1334
          %1338 = vset.pattern.permute.xlu0 0
          %1339 = vperm.xlu0 %1338, %v1301
          %v1340 = vpop.permute.xlu0 %1339
          %1343 = vset.pattern.permute.xlu0 0
          %1344 = vperm.xlu0 %1343, %v1302
          %v1345 = vpop.permute.xlu0 %1344
          %1348 = vset.pattern.permute.xlu0 0
          %1349 = vperm.xlu0 %1348, %v1303
          %v1350 = vpop.permute.xlu0 %1349
          %1353 = vset.pattern.permute.xlu0 0
          %1354 = vperm.xlu0 %1353, %v1304
          %v1355 = vpop.permute.xlu0 %1354
          %1358 = vset.pattern.permute.xlu0 0
          %1359 = vperm.xlu0 %1358, %v1305
          %v1360 = vpop.permute.xlu0 %1359
          %1363 = vset.pattern.permute.xlu0 0
          %1364 = vperm.xlu0 %1363, %v1306
          %v1365 = vpop.permute.xlu0 %1364
          %1368 = vset.pattern.permute.xlu0 0
          %1369 = vperm.xlu0 %1368, %v1307
          %v1370 = vpop.permute.xlu0 %1369
          %1373 = vset.pattern.permute.xlu0 0
          %1374 = vperm.xlu0 %1373, %v1308
          %v1375 = vpop.permute.xlu0 %1374
          %1378 = vset.pattern.permute.xlu0 0
          %1379 = vperm.xlu0 %1378, %v1309
          %v1380 = vpop.permute.xlu0 %1379
          %1383 = vset.pattern.permute.xlu0 0
          %1384 = vperm.xlu0 %1383, %v1310
          %v1385 = vpop.permute.xlu0 %1384
          %1388 = vset.pattern.permute.xlu0 0
          %1389 = vperm.xlu0 %1388, %v1311
          %v1390 = vpop.permute.xlu0 %1389
          %1393 = vset.pattern.permute.xlu0 0
          %1394 = vperm.xlu0 %1393, %v1312
          %v1395 = vpop.permute.xlu0 %1394
          %1398 = vset.pattern.permute.xlu0 0
          %1399 = vperm.xlu0 %1398, %v1313
          %v1400 = vpop.permute.xlu0 %1399
          %1403 = vset.pattern.permute.xlu0 0
          %1404 = vperm.xlu0 %1403, %v1314
          %v1405 = vpop.permute.xlu0 %1404
          %1408 = vset.pattern.permute.xlu0 0
          %1409 = vperm.xlu0 %1408, %v1315
          %v1410 = vpop.permute.xlu0 %1409
          %v1412 = vmul.f32 %v1316, %v1335
          %v1413 = vmul.f32 %v1317, %v1340
          %v1414 = vmul.f32 %v1318, %v1345
          %v1415 = vmul.f32 %v1319, %v1350
          %v1416 = vmul.f32 %v1320, %v1355
          %v1417 = vmul.f32 %v1321, %v1360
          %v1418 = vmul.f32 %v1322, %v1365
          %v1419 = vmul.f32 %v1323, %v1370
          %v1420 = vmul.f32 %v1324, %v1375
          %v1421 = vmul.f32 %v1325, %v1380
          %v1422 = vmul.f32 %v1326, %v1385
          %v1423 = vmul.f32 %v1327, %v1390
          %v1424 = vmul.f32 %v1328, %v1395
          %v1425 = vmul.f32 %v1329, %v1400
          %v1426 = vmul.f32 %v1330, %v1405
          %v1427 = vmul.f32 %v1331, %v1410
          %1428 = vst [vmem:[%s391] sm:$0xff] %v1412
          %1429 = vst [vmem:[%s391 + $0x8] sm:$0xff] %v1413
          %1430 = vst [vmem:[%s391 + $0x10] sm:$0xff] %v1414
          %1431 = vst [vmem:[%s391 + $0x18] sm:$0xff] %v1415
          %1432 = vst [vmem:[%s391 + $0x20] sm:$0xff] %v1416
          %1433 = vst [vmem:[%s391 + $0x28] sm:$0xff] %v1417
          %1434 = vst [vmem:[%s391 + $0x30] sm:$0xff] %v1418
          %1435 = vst [vmem:[%s391 + $0x38] sm:$0xff] %v1419
          %1436 = vst [vmem:[%s391 + $0x40] sm:$0xff] %v1420
          %1437 = vst [vmem:[%s391 + $0x48] sm:$0xff] %v1421
          %1438 = vst [vmem:[%s391 + $0x50] sm:$0xff] %v1422
          %1439 = vst [vmem:[%s391 + $0x58] sm:$0xff] %v1423
          %1440 = vst [vmem:[%s391 + $0x60] sm:$0xff] %v1424
          %1441 = vst [vmem:[%s391 + $0x68] sm:$0xff] %v1425
          %1442 = vst [vmem:[%s391 + $0x70] sm:$0xff] %v1426
          %1443 = vst [vmem:[%s391 + $0x78] sm:$0xff] %v1427
        $region60: #{tpu_custom_call.1} parent=35 // pred_fallthru
          _
        %s1444 = sand.u32 %s183, 1
        %s1445 = scalar_lea.sflag [#allocation7], %s1444
        %s1446 = sand.u32 %s183, 1
        %s1447 = smul.addr %s1446, 128
        %s1448 = scalar_lea.vmem [#allocation13], %s1447
        // Predicated region
        $region61: #{tpu_custom_call.1} parent=35 // pred_check
          %p1449 = pneg %p193
        $region62: #{tpu_custom_call.1} parent=35 // pred_check_branch
          %1451 = sbr.rel (%p1449) target = $region64
        $region63: #{tpu_custom_call.1} parent=35 // pred_region
          %s1452 = smul.u32 16, %s35
          %1454 = vsyncadd %s1445, 0
          %s1455 = smul.addr %s34, 32
          %s1456 = sadd.s32 %s1452, %s1455
          %s1457 = smul.addr %s33, 64
          %s1458 = sadd.s32 %s1456, %s1457
          %s1459 = smul.addr %s1458, 8
          %s1460 = scalar_lea.hbm %s4, %s1459
          %s1461 = sshll.u32 %s1448, 4
          %s1462 = int_to_ptr.vmem [resolvable:$true] %s1461
          %s1463 = sshll.u32 %s1460, 4
          %s1464 = int_to_ptr.hbm [resolvable:$true] %s1463
          %1469 = dma.vmem_to_hbm [thread:$0]  %s1462, 2048, %s1464, %s1445, 128, 128, 8
        $region64: #{tpu_custom_call.1} parent=35 // pred_fallthru
          _
      $region36: #{tpu_custom_call.1} parent=5 // pred_fallthru
        _
      %p1470 = scmp.le.s32.totalorder 2, %s22
      // Predicated region
      $region65: #{tpu_custom_call.1} parent=5 // pred_check
        %p1471 = pneg %p1470
      $region66: #{tpu_custom_call.1} parent=5 // pred_check_branch
        %1473 = sbr.rel (%p1471) target = $region68
      $region67: #{tpu_custom_call.1} parent=5 // pred_region
        %s1474 = ssub.s32 %s22, 2
        // Predicated region
        $region69: #{tpu_custom_call.1} parent=67 // pred_check
          %p1475 = pneg %p199
        $region70: #{tpu_custom_call.1} parent=67 // pred_check_branch
          %1477 = sbr.rel (%p1475) target = $region72
        $region71: #{tpu_custom_call.1} parent=67 // pred_region
          %s1478 = sand.u32 %s184, 1
          %s1479 = scalar_lea.sflag [#allocation7], %s1478
          %s1480 = sand.u32 %s184, 1
          %s1481 = smul.addr %s1480, 128
          %s1482 = scalar_lea.vmem [#allocation13], %s1481
          %1484 = dma.done %s1479, 2048
        $region72: #{tpu_custom_call.1} parent=67 // pred_fallthru
          _
      $region68: #{tpu_custom_call.1} parent=5 // pred_fallthru
        _
    $region6: #{tpu_custom_call.1} parent=1 // loop_footer
      %s26 = sadd.s32 1, %s22
    $region7: #{tpu_custom_call.1} parent=1 // loop_footer_branch
      %21 = sbr.rel target = $region3
    $region8: #{tpu_custom_call.1} parent=1 // loop_exit
      _
    %1485 = vsyncpa [#allocation6], 1
    %s1486 = scalar_lea.sflag [#allocation6], 1
    %1487 = vsyncpa %s1486, 1
    %1488 = vsyncpa [#allocation9], 1
    %s1489 = scalar_lea.sflag [#allocation9], 1
    %1490 = vsyncpa %s1489, 1
    %1491 = vsyncpa [#allocation12], 1
    %s1492 = scalar_lea.sflag [#allocation12], 1
    %1493 = vsyncpa %s1492, 1
    %1494 = vsyncpa [#allocation7], 1
    %s1495 = scalar_lea.sflag [#allocation7], 1
    %1496 = vsyncpa %s1495, 1

</llo_original>
